<compile_context>
chip_gen: v7x
topology: tpu7x:2x2x1
jax: 0.10.0
libtpu: 0.0.40
codegen_flags: <defaults>
</compile_context>

<pallas_src>
import functools

import jax
import jax.numpy as jnp
from jax.experimental import pallas as pl
from jax.experimental.pallas import tpu as pltpu


def _entropy_kernel(x_ref,
                    w1_ref, b1_ref,
                    w2_ref, b2_ref,
                    w3_ref, b3_ref,
                    w4_ref, b4_ref,
                    o_ref, *, elementwise_dtype):
    # x_ref: (Cin, TP) channels-first pixel tile; lane dim = pixels (lane-dense stores).
    # w*_ref: bf16 (Cout, Cin); b*_ref: f32 (Cout, 1).
    x = x_ref[...].astype(jnp.bfloat16)   # hidden under MXU work

    def layer(h_in, w_ref, b_ref, act):
        # MXU matmul, f32 accumulation; bias added straight off the f32 accumulator.
        h = jnp.dot(w_ref[...], h_in, preferred_element_type=jnp.float32) + b_ref[...]
        if not act:
            return h
        # tanh-approx GELU: 1 EUP tanh + a handful of VALU ops, in elementwise_dtype
        # (bf16 on v6e/v7x halves VALU cycles and the spilled intermediate).
        h = jax.nn.gelu(h.astype(elementwise_dtype), approximate=True)
        return h.astype(jnp.bfloat16)     # operand dtype for the next MXU matmul

    h = layer(x, w1_ref, b1_ref, True)    # (320, TP)
    h = layer(h, w2_ref, b2_ref, True)    # (256, TP)
    h = layer(h, w3_ref, b3_ref, True)    # (128, TP)
    h = layer(h, w4_ref, b4_ref, False)   # (out_dim, TP), f32
    o_ref[...] = h.astype(o_ref.dtype)


def _pick_tile_pix(hw, n_batch, max_tile=1024, min_steps=8):
    """Largest multiple of 128 dividing hw, capped at max_tile, preferring tiles that
    keep the total grid (n_batch * hw/tile) at >= min_steps so both v7x TensorCores
    stay busy and input DMA can pipeline.  Falls back to the full hw (legal full-dim
    block; lanes masked, pixel grid collapses to 1 step) if hw has no 128-divisor."""
    divisors = [t for t in range(128, min(hw, max_tile) + 1, 128) if hw % t == 0]
    if not divisors:
        return hw
    for t in reversed(divisors):
        if n_batch * (hw // t) >= min_steps:
            return t
    return divisors[0]   # smallest legal tile -> maximizes step count


def _vmem_limit_bytes(cin, out_dim, tile_pix, ew_bytes):
    """Explicit VMEM footprint budget (bytes) -> scoped limit to hand the compiler."""
    io = 2 * (cin + out_dim) * tile_pix * 4                       # double-buffered in/out blocks (f32)
    wb = (2 * (320 * cin + 256 * 320 + 128 * 256 + out_dim * 128)  # bf16 weights (single-buffered)
          + 4 * 128 * (320 + 256 + 128 + out_dim))                 # f32 biases, lane-padded to 128
    inter = (320 + 256 + 128) * tile_pix * (4 + ew_bytes)          # f32 dot results + ew activations
    budget = io + wb + inter + (2 << 20)                           # + margin
    # 2x headroom, floor 32 MiB.  (v7x physical VMEM is 64 MiB -- keep tile_pix such that
    # 2*budget stays below it; v5e/v6e have 128 MiB and tolerate max_tile=4096.)
    return int(min(96 * 2**20, max(32 * 2**20, 2 * budget)))


def entropy_parameters_pallas(params_nchw, weights, *, tile_pix=None, max_tile=1024,
                              min_grid_steps=8, elementwise_dtype=jnp.bfloat16,
                              vmem_limit_bytes=None):
    """Forward pass of EntropyParameters.

    params_nchw : (N, in_dim, H, W) float32
    weights     : dict with w1..w4 (Cout, Cin) f32 and b1..b4 (Cout, 1) f32
                  (the natural squeeze of Conv2d(k=1) weights (Cout, Cin, 1, 1))
    returns     : (N, out_dim, H, W) float32

    Precision: bf16 MXU inputs (f32 accumulation) + tanh-approx GELU in
    `elementwise_dtype` (default bf16).  Use elementwise_dtype=jnp.float32 on v5e
    or when closer parity with the f32/erf reference is needed.
    """
    N, Cin, H, W = params_nchw.shape
    out_dim = weights["w4"].shape[0]
    HW = H * W

    if tile_pix is None:
        tile_pix = _pick_tile_pix(HW, N, max_tile, min_grid_steps)
    assert HW % tile_pix == 0, "H*W must be divisible by tile_pix"

    if vmem_limit_bytes is None:
        ew_bytes = jnp.dtype(elementwise_dtype).itemsize
        vmem_limit_bytes = _vmem_limit_bytes(Cin, out_dim, tile_pix, ew_bytes)

    # Free (contiguous) reshape: no transpose, no HBM round trip.
    x = params_nchw.reshape(N, Cin, HW)

    # MXU inputs in bf16 (tiny one-off convert of ~140K weight elements).
    w1 = weights["w1"].astype(jnp.bfloat16)
    w2 = weights["w2"].astype(jnp.bfloat16)
    w3 = weights["w3"].astype(jnp.bfloat16)
    w4 = weights["w4"].astype(jnp.bfloat16)
    b1, b2, b3, b4 = weights["b1"], weights["b2"], weights["b3"], weights["b4"]

    # Weights/biases: single full block, constant index -> single-buffered resident in VMEM.
    def const_spec(shape):
        return pl.BlockSpec(shape, lambda b, j: (0, 0), pipeline_mode=pl.Buffered(1))

    in_specs = [
        pl.BlockSpec((None, Cin, tile_pix), lambda b, j: (b, 0, j)),
        const_spec(w1.shape), const_spec(b1.shape),
        const_spec(w2.shape), const_spec(b2.shape),
        const_spec(w3.shape), const_spec(b3.shape),
        const_spec(w4.shape), const_spec(b4.shape),
    ]

    kernel = functools.partial(_entropy_kernel, elementwise_dtype=elementwise_dtype)

    y = pl.pallas_call(
        kernel,
        out_shape=jax.ShapeDtypeStruct((N, out_dim, HW), params_nchw.dtype),
        grid_spec=pltpu.PrefetchScalarGridSpec(
            num_scalar_prefetch=0,
            grid=(N, HW // tile_pix),
            in_specs=in_specs,
            out_specs=pl.BlockSpec((None, out_dim, tile_pix), lambda b, j: (b, 0, j)),
        ),
        compiler_params=pltpu.CompilerParams(
            dimension_semantics=("parallel", "parallel"),
            vmem_limit_bytes=vmem_limit_bytes,
        ),
    )(x,
      w1, b1,
      w2, b2,
      w3, b3,
      w4, b4)

    # Free reshape back to NCHW.
    return y.reshape(N, out_dim, H, W)


def init_weights(key, in_dim, out_dim, dtype=jnp.float32):
    """Deterministic synthetic parameters matching nn.Conv2d(k=1) shapes.

    A 1x1 Conv2d weight (Cout, Cin, 1, 1) is stored squeezed as (Cout, Cin);
    bias is stored as (Cout, 1) so it broadcasts along the pixel (lane) dim.
    """
    dims = [(in_dim, 320), (320, 256), (256, 128), (128, out_dim)]
    weights = {}
    for idx, (cin, cout) in enumerate(dims, start=1):
        key, kw, kb = jax.random.split(key, 3)
        scale = 1.0 / jnp.sqrt(jnp.asarray(cin, dtype))
        weights[f"w{idx}"] = jax.random.normal(kw, (cout, cin), dtype) * scale
        weights[f"b{idx}"] = jax.random.normal(kb, (cout, 1), dtype) * 0.01
    return weights


def reference_forward(x_nchw, weights):
    """Pure-JAX f32 reference with nn.GELU()'s default exact-erf semantics."""
    N, Cin, H, W = x_nchw.shape
    h = x_nchw.reshape(N, Cin, H * W)

    def layer(h, w, b, act):
        y = jnp.einsum("oi,nip->nop", w, h) + b[None, :, :]
        return jax.nn.gelu(y, approximate=False) if act else y

    h = layer(h, weights["w1"], weights["b1"], True)
    h = layer(h, weights["w2"], weights["b2"], True)
    h = layer(h, weights["w3"], weights["b3"], True)
    h = layer(h, weights["w4"], weights["b4"], False)
    out_dim = h.shape[1]
    return h.reshape(N, out_dim, H, W)


if __name__ == "__main__":
    in_dim, out_dim = 64, 32
    N, H, W = 2, 16, 16

    key = jax.random.PRNGKey(0)
    key, kx = jax.random.split(key)
    x = jax.random.normal(kx, (N, in_dim, H, W), jnp.float32)
    weights = init_weights(key, in_dim, out_dim)

    fwd = jax.jit(entropy_parameters_pallas)
    out = jax.block_until_ready(fwd(x, weights))

    ref = reference_forward(x, weights)
    assert out.shape == (N, out_dim, H, W)
    # Deliberate precision tradeoffs vs. the f32/erf reference: bf16 MXU inputs,
    # bf16 tanh-approx GELU (typical max-abs err ~2-4e-2) -> tolerance set accordingly.
    err = float(jnp.max(jnp.abs(out - ref)))
    assert jnp.allclose(out, ref, atol=1e-1, rtol=5e-2), f"max abs err {err}"

    print("KERNEL_OK")
</pallas_src>

<mosaic_0001>
module attributes {stable_mosaic.version = 11 : i64} {
  func.func @_entropy_kernel(%arg0: i32, %arg1: i32, %arg2: memref<1x64x128xf32, #tpu.memory_space<vmem>>, %arg3: memref<320x64xbf16, #tpu.memory_space<vmem>>, %arg4: memref<320x1xf32, #tpu.memory_space<vmem>>, %arg5: memref<256x320xbf16, #tpu.memory_space<vmem>>, %arg6: memref<256x1xf32, #tpu.memory_space<vmem>>, %arg7: memref<128x256xbf16, #tpu.memory_space<vmem>>, %arg8: memref<128x1xf32, #tpu.memory_space<vmem>>, %arg9: memref<32x128xbf16, #tpu.memory_space<vmem>>, %arg10: memref<32x1xf32, #tpu.memory_space<vmem>>, %arg11: memref<1x32x128xf32, #tpu.memory_space<vmem>>) attributes {dimension_semantics = [#tpu.dimension_semantics<parallel>, #tpu.dimension_semantics<parallel>], iteration_bounds = array<i64: 2, 2>, scalar_prefetch = 0 : i64, scratch_operands = 0 : i64, tpu.core_type = #tpu.core_type<tc>, window_params = [{transform_indices = @transform_0, window_bounds = array<i64: 1, 64, 128>}, {pipeline_mode = #tpu.pipeline_mode<synchronous>, transform_indices = @transform_1, window_bounds = array<i64: 320, 64>}, {pipeline_mode = #tpu.pipeline_mode<synchronous>, transform_indices = @transform_2, window_bounds = array<i64: 320, 1>}, {pipeline_mode = #tpu.pipeline_mode<synchronous>, transform_indices = @transform_3, window_bounds = array<i64: 256, 320>}, {pipeline_mode = #tpu.pipeline_mode<synchronous>, transform_indices = @transform_4, window_bounds = array<i64: 256, 1>}, {pipeline_mode = #tpu.pipeline_mode<synchronous>, transform_indices = @transform_5, window_bounds = array<i64: 128, 256>}, {pipeline_mode = #tpu.pipeline_mode<synchronous>, transform_indices = @transform_6, window_bounds = array<i64: 128, 1>}, {pipeline_mode = #tpu.pipeline_mode<synchronous>, transform_indices = @transform_7, window_bounds = array<i64: 32, 128>}, {pipeline_mode = #tpu.pipeline_mode<synchronous>, transform_indices = @transform_8, window_bounds = array<i64: 32, 1>}, {transform_indices = @transform_9, window_bounds = array<i64: 1, 32, 128>}]} {
    %c0 = arith.constant 0 : index
    %c0_0 = arith.constant 0 : index
    %c0_1 = arith.constant 0 : index
    %0 = vector.load %arg2[%c0, %c0_0, %c0_1] : memref<1x64x128xf32, #tpu.memory_space<vmem>>, vector<1x64x128xf32>
    %1 = vector.shape_cast %0 : vector<1x64x128xf32> to vector<64x128xf32>
    %2 = arith.truncf %1 : vector<64x128xf32> to vector<64x128xbf16>
    %c0_2 = arith.constant 0 : index
    %c0_3 = arith.constant 0 : index
    %3 = vector.load %arg3[%c0_2, %c0_3] : memref<320x64xbf16, #tpu.memory_space<vmem>>, vector<320x64xbf16>
    %cst = arith.constant dense<0.000000e+00> : vector<320x128xf32>
    %4 = tpu.matmul %3, %2, %cst {dimension_numbers = #tpu.dot_dimension_numbers<[1], [0], [0], [1], [0, 0, 1, 1], [], []>} : vector<320x64xbf16>, vector<64x128xbf16>, vector<320x128xf32> -> vector<320x128xf32>
    %c0_4 = arith.constant 0 : index
    %c0_5 = arith.constant 0 : index
    %5 = vector.load %arg4[%c0_4, %c0_5] : memref<320x1xf32, #tpu.memory_space<vmem>>, vector<320x1xf32>
    %6 = vector.broadcast %5 : vector<320x1xf32> to vector<320x128xf32>
    %7 = arith.addf %4, %6 : vector<320x128xf32>
    %8 = arith.truncf %7 : vector<320x128xf32> to vector<320x128xbf16>
    %9 = arith.mulf %8, %8 : vector<320x128xbf16>
    %10 = arith.mulf %8, %9 : vector<320x128xbf16>
    %cst_6 = arith.constant 4.467770e-02 : bf16
    %11 = vector.broadcast %cst_6 : bf16 to vector<320x128xbf16>
    %12 = arith.mulf %11, %10 : vector<320x128xbf16>
    %13 = arith.addf %8, %12 : vector<320x128xbf16>
    %cst_7 = arith.constant 7.968750e-01 : bf16
    %14 = vector.broadcast %cst_7 : bf16 to vector<320x128xbf16>
    %15 = arith.mulf %14, %13 : vector<320x128xbf16>
    %16 = math.tanh %15 : vector<320x128xbf16>
    %cst_8 = arith.constant 1.000000e+00 : bf16
    %17 = vector.broadcast %cst_8 : bf16 to vector<320x128xbf16>
    %18 = arith.addf %17, %16 : vector<320x128xbf16>
    %cst_9 = arith.constant 5.000000e-01 : bf16
    %19 = vector.broadcast %cst_9 : bf16 to vector<320x128xbf16>
    %20 = arith.mulf %19, %18 : vector<320x128xbf16>
    %21 = arith.mulf %8, %20 : vector<320x128xbf16>
    %c0_10 = arith.constant 0 : index
    %c0_11 = arith.constant 0 : index
    %22 = vector.load %arg5[%c0_10, %c0_11] : memref<256x320xbf16, #tpu.memory_space<vmem>>, vector<256x320xbf16>
    %cst_12 = arith.constant dense<0.000000e+00> : vector<256x128xf32>
    %23 = tpu.matmul %22, %21, %cst_12 {dimension_numbers = #tpu.dot_dimension_numbers<[1], [0], [0], [1], [0, 0, 1, 1], [], []>} : vector<256x320xbf16>, vector<320x128xbf16>, vector<256x128xf32> -> vector<256x128xf32>
    %c0_13 = arith.constant 0 : index
    %c0_14 = arith.constant 0 : index
    %24 = vector.load %arg6[%c0_13, %c0_14] : memref<256x1xf32, #tpu.memory_space<vmem>>, vector<256x1xf32>
    %25 = vector.broadcast %24 : vector<256x1xf32> to vector<256x128xf32>
    %26 = arith.addf %23, %25 : vector<256x128xf32>
    %27 = arith.truncf %26 : vector<256x128xf32> to vector<256x128xbf16>
    %28 = arith.mulf %27, %27 : vector<256x128xbf16>
    %29 = arith.mulf %27, %28 : vector<256x128xbf16>
    %cst_15 = arith.constant 4.467770e-02 : bf16
    %30 = vector.broadcast %cst_15 : bf16 to vector<256x128xbf16>
    %31 = arith.mulf %30, %29 : vector<256x128xbf16>
    %32 = arith.addf %27, %31 : vector<256x128xbf16>
    %cst_16 = arith.constant 7.968750e-01 : bf16
    %33 = vector.broadcast %cst_16 : bf16 to vector<256x128xbf16>
    %34 = arith.mulf %33, %32 : vector<256x128xbf16>
    %35 = math.tanh %34 : vector<256x128xbf16>
    %cst_17 = arith.constant 1.000000e+00 : bf16
    %36 = vector.broadcast %cst_17 : bf16 to vector<256x128xbf16>
    %37 = arith.addf %36, %35 : vector<256x128xbf16>
    %cst_18 = arith.constant 5.000000e-01 : bf16
    %38 = vector.broadcast %cst_18 : bf16 to vector<256x128xbf16>
    %39 = arith.mulf %38, %37 : vector<256x128xbf16>
    %40 = arith.mulf %27, %39 : vector<256x128xbf16>
    %c0_19 = arith.constant 0 : index
    %c0_20 = arith.constant 0 : index
    %41 = vector.load %arg7[%c0_19, %c0_20] : memref<128x256xbf16, #tpu.memory_space<vmem>>, vector<128x256xbf16>
    %cst_21 = arith.constant dense<0.000000e+00> : vector<128x128xf32>
    %42 = tpu.matmul %41, %40, %cst_21 {dimension_numbers = #tpu.dot_dimension_numbers<[1], [0], [0], [1], [0, 0, 1, 1], [], []>} : vector<128x256xbf16>, vector<256x128xbf16>, vector<128x128xf32> -> vector<128x128xf32>
    %c0_22 = arith.constant 0 : index
    %c0_23 = arith.constant 0 : index
    %43 = vector.load %arg8[%c0_22, %c0_23] : memref<128x1xf32, #tpu.memory_space<vmem>>, vector<128x1xf32>
    %44 = vector.broadcast %43 : vector<128x1xf32> to vector<128x128xf32>
    %45 = arith.addf %42, %44 : vector<128x128xf32>
    %46 = arith.truncf %45 : vector<128x128xf32> to vector<128x128xbf16>
    %47 = arith.mulf %46, %46 : vector<128x128xbf16>
    %48 = arith.mulf %46, %47 : vector<128x128xbf16>
    %cst_24 = arith.constant 4.467770e-02 : bf16
    %49 = vector.broadcast %cst_24 : bf16 to vector<128x128xbf16>
    %50 = arith.mulf %49, %48 : vector<128x128xbf16>
    %51 = arith.addf %46, %50 : vector<128x128xbf16>
    %cst_25 = arith.constant 7.968750e-01 : bf16
    %52 = vector.broadcast %cst_25 : bf16 to vector<128x128xbf16>
    %53 = arith.mulf %52, %51 : vector<128x128xbf16>
    %54 = math.tanh %53 : vector<128x128xbf16>
    %cst_26 = arith.constant 1.000000e+00 : bf16
    %55 = vector.broadcast %cst_26 : bf16 to vector<128x128xbf16>
    %56 = arith.addf %55, %54 : vector<128x128xbf16>
    %cst_27 = arith.constant 5.000000e-01 : bf16
    %57 = vector.broadcast %cst_27 : bf16 to vector<128x128xbf16>
    %58 = arith.mulf %57, %56 : vector<128x128xbf16>
    %59 = arith.mulf %46, %58 : vector<128x128xbf16>
    %c0_28 = arith.constant 0 : index
    %c0_29 = arith.constant 0 : index
    %60 = vector.load %arg9[%c0_28, %c0_29] : memref<32x128xbf16, #tpu.memory_space<vmem>>, vector<32x128xbf16>
    %cst_30 = arith.constant dense<0.000000e+00> : vector<32x128xf32>
    %61 = tpu.matmul %60, %59, %cst_30 {dimension_numbers = #tpu.dot_dimension_numbers<[1], [0], [0], [1], [0, 0, 1, 1], [], []>} : vector<32x128xbf16>, vector<128x128xbf16>, vector<32x128xf32> -> vector<32x128xf32>
    %c0_31 = arith.constant 0 : index
    %c0_32 = arith.constant 0 : index
    %62 = vector.load %arg10[%c0_31, %c0_32] : memref<32x1xf32, #tpu.memory_space<vmem>>, vector<32x1xf32>
    %63 = vector.broadcast %62 : vector<32x1xf32> to vector<32x128xf32>
    %64 = arith.addf %61, %63 : vector<32x128xf32>
    %c0_33 = arith.constant 0 : index
    %c0_34 = arith.constant 0 : index
    %c0_35 = arith.constant 0 : index
    %65 = vector.load %arg11[%c0_33, %c0_34, %c0_35] : memref<1x32x128xf32, #tpu.memory_space<vmem>>, vector<1x32x128xf32>
    %66 = vector.shape_cast %65 : vector<1x32x128xf32> to vector<32x128xf32>
    %67 = vector.shape_cast %64 : vector<32x128xf32> to vector<1x32x128xf32>
    tpu.vector_store %arg11[%c0_33, %c0_34, %c0_35], %67 {strides = array<i32>} : memref<1x32x128xf32, #tpu.memory_space<vmem>>, vector<1x32x128xf32>,
    return
  }
  func.func @transform_0(%arg0: i32, %arg1: i32) -> (i32, i32, i32) {
    %c0_i32 = arith.constant 0 : i32
    %c0_i32_0 = arith.constant 0 : i32
    return %arg0, %c0_i32, %arg1 : i32, i32, i32
  }
  func.func @transform_1(%arg0: i32, %arg1: i32) -> (i32, i32) {
    %c0_i32 = arith.constant 0 : i32
    %c0_i32_0 = arith.constant 0 : i32
    %c0_i32_1 = arith.constant 0 : i32
    return %c0_i32, %c0_i32_0 : i32, i32
  }
  func.func @transform_2(%arg0: i32, %arg1: i32) -> (i32, i32) {
    %c0_i32 = arith.constant 0 : i32
    %c0_i32_0 = arith.constant 0 : i32
    %c0_i32_1 = arith.constant 0 : i32
    return %c0_i32, %c0_i32_0 : i32, i32
  }
  func.func @transform_3(%arg0: i32, %arg1: i32) -> (i32, i32) {
    %c0_i32 = arith.constant 0 : i32
    %c0_i32_0 = arith.constant 0 : i32
    %c0_i32_1 = arith.constant 0 : i32
    return %c0_i32, %c0_i32_0 : i32, i32
  }
  func.func @transform_4(%arg0: i32, %arg1: i32) -> (i32, i32) {
    %c0_i32 = arith.constant 0 : i32
    %c0_i32_0 = arith.constant 0 : i32
    %c0_i32_1 = arith.constant 0 : i32
    return %c0_i32, %c0_i32_0 : i32, i32
  }
  func.func @transform_5(%arg0: i32, %arg1: i32) -> (i32, i32) {
    %c0_i32 = arith.constant 0 : i32
    %c0_i32_0 = arith.constant 0 : i32
    %c0_i32_1 = arith.constant 0 : i32
    return %c0_i32, %c0_i32_0 : i32, i32
  }
  func.func @transform_6(%arg0: i32, %arg1: i32) -> (i32, i32) {
    %c0_i32 = arith.constant 0 : i32
    %c0_i32_0 = arith.constant 0 : i32
    %c0_i32_1 = arith.constant 0 : i32
    return %c0_i32, %c0_i32_0 : i32, i32
  }
  func.func @transform_7(%arg0: i32, %arg1: i32) -> (i32, i32) {
    %c0_i32 = arith.constant 0 : i32
    %c0_i32_0 = arith.constant 0 : i32
    %c0_i32_1 = arith.constant 0 : i32
    return %c0_i32, %c0_i32_0 : i32, i32
  }
  func.func @transform_8(%arg0: i32, %arg1: i32) -> (i32, i32) {
    %c0_i32 = arith.constant 0 : i32
    %c0_i32_0 = arith.constant 0 : i32
    %c0_i32_1 = arith.constant 0 : i32
    return %c0_i32, %c0_i32_0 : i32, i32
  }
  func.func @transform_9(%arg0: i32, %arg1: i32) -> (i32, i32, i32) {
    %c0_i32 = arith.constant 0 : i32
    %c0_i32_0 = arith.constant 0 : i32
    return %arg0, %c0_i32, %arg1 : i32, i32, i32
  }
}

</mosaic_0001>

<llo_original>
// kernel: entropy_parameters_pallas.1
$region0: #{entropy_parameters_pallas.1}
  #allocation0 [shape = 'u32[]', space=smem, size = 0x4, offset = 0x4, fixed_abs, tag = 'smem constant byte address 0x4 - core index']
  #allocation1 [shape = 'u32[144,128]{1,0:T(1,128)}', space=vmem, size = 0x12000, scoped, tag = 'internal scratch']
  %s0 = inlined_call_operand.vmem [shape: f32[2,64,256], index: 0, kind: input, shape index: {}]
  %s1 = inlined_call_operand.vmem [shape: bf16[320,64], index: 1, kind: input, shape index: {}]
  %s2 = inlined_call_operand.vmem [shape: f32[320,1], index: 2, kind: input, shape index: {}]
  %s3 = inlined_call_operand.vmem [shape: bf16[256,320], index: 3, kind: input, shape index: {}]
  %s4 = inlined_call_operand.vmem [shape: f32[256,1], index: 4, kind: input, shape index: {}]
  %s5 = inlined_call_operand.vmem [shape: bf16[128,256], index: 5, kind: input, shape index: {}]
  %s6 = inlined_call_operand.vmem [shape: f32[128,1], index: 6, kind: input, shape index: {}]
  %s7 = inlined_call_operand.vmem [shape: bf16[32,128], index: 7, kind: input, shape index: {}]
  %s8 = inlined_call_operand.vmem [shape: f32[32,1], index: 8, kind: input, shape index: {}]
  %s9 = inlined_call_operand.vmem [shape: f32[2,32,256], index: 9, kind: output, shape index: {}]
  %s10 = sld [smem:[#allocation0]]
  $region141: #{entropy_parameters_pallas.1} parent=0
    _
  %s12 = ssub.s32 1, %s10
  %s13 = scalar_select 0, %s12, %s10
  $region1: #{entropy_parameters_pallas.1} parent=0
    #allocation2 [shape = 'u8[65536]{0}', space=vmem, size = 0x10000, scoped, tag = 'input window, operand 0']
    #allocation3 [shape = 'u8[32768]{0}', space=vmem, size = 0x8000, scoped, tag = 'output window, operand 0']
    loop: start=0, step=1, limit=6
    $region2: #{entropy_parameters_pallas.1} parent=1 // loop_pre_header
      _
    $region3: #{entropy_parameters_pallas.1} parent=1 // loop_header
      %s15 = sphi 0, %s19
      %p16 = scmp.ge.s32.totalorder %s15, 6
      %s22 = sphi 0, %s34
      %s23 = sphi 0, %s30
      %s24 = sphi 0, %s22
      %s25 = sphi 0, %s23
      %s26 = sphi 0, %s24
      %s27 = sphi 0, %s25
      %s39 = sphi 0, %s41
      %s42 = sphi 0, %s39
      %s43 = sphi 0, %s42
      %s59 = sphi 0, %s43
      %s63 = sphi 0, %s63
      %s65 = sphi 0, %s63
      %s66 = sphi 0, %s65
      %s80 = sphi 0, %s66
      %s84 = sphi 0, %s84
      %s86 = sphi 0, %s84
      %s87 = sphi 0, %s86
      %s101 = sphi 0, %s87
      %s105 = sphi 0, %s105
      %s107 = sphi 0, %s105
      %s108 = sphi 0, %s107
      %s122 = sphi 0, %s108
      %s126 = sphi 0, %s126
      %s128 = sphi 0, %s126
      %s129 = sphi 0, %s128
      %s143 = sphi 0, %s129
      %s147 = sphi 0, %s147
      %s149 = sphi 0, %s147
      %s150 = sphi 0, %s149
      %s164 = sphi 0, %s150
      %s168 = sphi 0, %s168
      %s170 = sphi 0, %s168
      %s171 = sphi 0, %s170
      %s185 = sphi 0, %s171
      %s189 = sphi 0, %s189
      %s191 = sphi 0, %s189
      %s192 = sphi 0, %s191
      %s206 = sphi 0, %s192
      %s210 = sphi 0, %s210
      %s212 = sphi 0, %s210
      %s213 = sphi 0, %s212
      %s227 = sphi 0, %s213
      %s235 = sphi 0, %s237
      %s238 = sphi 0, %s235
      %s239 = sphi 0, %s238
      %s255 = sphi 0, %s239
    $region4: #{entropy_parameters_pallas.1} parent=1 // loop_header_branch
      %18 = sbr.rel (%p16) target = $region8
    $region5: #{entropy_parameters_pallas.1} parent=1 // loop_body
      %s20 = ssub.s32 %s15, 1
      %s21 = ssub.s32 %s15, 2
      %s28 = sadd.s32 1, %s23
      %p29 = scmp.ge.s32.totalorder %s28, 2
      %s30 = scalar_select %p29, 0, %s28
      %s31 = sadd.s32 1, %s22
      %s32 = scalar_select %p29, %s31, %s22
      %p33 = scmp.ge.s32.totalorder %s32, 2
      %s34 = scalar_select %p33, 0, %s32
      %s35 = ssub.s32 %s22, %s34
      %s36 = ssub.s32 %s23, %s30
      %s37 = sor.u32 %s35, %s36
      %p38 = scmp.eq.s32.totalorder %s37, 0
      %s40 = sadd.s32 %s39, 1
      %s41 = scalar_select %p38, %s39, %s40
      %p44 = pneg %p38
      %p45 = scmp.eq.s32.totalorder %s15, 3
      %p46 = por %p44, %p45
      %p47 = scmp.ne.s32.totalorder %s39, %s42
      %p48 = scmp.eq.s32.totalorder %s15, 0
      %p49 = por %p47, %p48
      %p50 = scmp.ne.s32.totalorder %s39, %s42
      %p51 = scmp.eq.s32.totalorder %s20, 3
      %p52 = por %p50, %p51
      %p53 = scmp.ne.s32.totalorder %s42, %s43
      %p54 = scmp.eq.s32.totalorder %s20, 0
      %p55 = por %p53, %p54
      %p56 = scmp.ne.s32.totalorder %s42, %s43
      %p57 = scmp.eq.s32.totalorder %s21, 3
      %p58 = por %p56, %p57
      %p60 = scmp.ne.s32.totalorder %s43, %s59
      %p61 = scmp.eq.s32.totalorder %s21, 0
      %p62 = por %p60, %p61
      %s64 = sadd.s32 %s63, 1
      %p67 = scmp.eq.s32.totalorder %s15, 3
      %p68 = scmp.ne.s32.totalorder %s63, %s65
      %p69 = scmp.eq.s32.totalorder %s15, 0
      %p70 = por %p68, %p69
      %p71 = scmp.ne.s32.totalorder %s63, %s65
      %p72 = scmp.eq.s32.totalorder %s20, 3
      %p73 = por %p71, %p72
      %p74 = scmp.ne.s32.totalorder %s65, %s66
      %p75 = scmp.eq.s32.totalorder %s20, 0
      %p76 = por %p74, %p75
      %p77 = scmp.ne.s32.totalorder %s65, %s66
      %p78 = scmp.eq.s32.totalorder %s21, 3
      %p79 = por %p77, %p78
      %p81 = scmp.ne.s32.totalorder %s66, %s80
      %p82 = scmp.eq.s32.totalorder %s21, 0
      %p83 = por %p81, %p82
      %s85 = sadd.s32 %s84, 1
      %p88 = scmp.eq.s32.totalorder %s15, 3
      %p89 = scmp.ne.s32.totalorder %s84, %s86
      %p90 = scmp.eq.s32.totalorder %s15, 0
      %p91 = por %p89, %p90
      %p92 = scmp.ne.s32.totalorder %s84, %s86
      %p93 = scmp.eq.s32.totalorder %s20, 3
      %p94 = por %p92, %p93
      %p95 = scmp.ne.s32.totalorder %s86, %s87
      %p96 = scmp.eq.s32.totalorder %s20, 0
      %p97 = por %p95, %p96
      %p98 = scmp.ne.s32.totalorder %s86, %s87
      %p99 = scmp.eq.s32.totalorder %s21, 3
      %p100 = por %p98, %p99
      %p102 = scmp.ne.s32.totalorder %s87, %s101
      %p103 = scmp.eq.s32.totalorder %s21, 0
      %p104 = por %p102, %p103
      %s106 = sadd.s32 %s105, 1
      %p109 = scmp.eq.s32.totalorder %s15, 3
      %p110 = scmp.ne.s32.totalorder %s105, %s107
      %p111 = scmp.eq.s32.totalorder %s15, 0
      %p112 = por %p110, %p111
      %p113 = scmp.ne.s32.totalorder %s105, %s107
      %p114 = scmp.eq.s32.totalorder %s20, 3
      %p115 = por %p113, %p114
      %p116 = scmp.ne.s32.totalorder %s107, %s108
      %p117 = scmp.eq.s32.totalorder %s20, 0
      %p118 = por %p116, %p117
      %p119 = scmp.ne.s32.totalorder %s107, %s108
      %p120 = scmp.eq.s32.totalorder %s21, 3
      %p121 = por %p119, %p120
      %p123 = scmp.ne.s32.totalorder %s108, %s122
      %p124 = scmp.eq.s32.totalorder %s21, 0
      %p125 = por %p123, %p124
      %s127 = sadd.s32 %s126, 1
      %p130 = scmp.eq.s32.totalorder %s15, 3
      %p131 = scmp.ne.s32.totalorder %s126, %s128
      %p132 = scmp.eq.s32.totalorder %s15, 0
      %p133 = por %p131, %p132
      %p134 = scmp.ne.s32.totalorder %s126, %s128
      %p135 = scmp.eq.s32.totalorder %s20, 3
      %p136 = por %p134, %p135
      %p137 = scmp.ne.s32.totalorder %s128, %s129
      %p138 = scmp.eq.s32.totalorder %s20, 0
      %p139 = por %p137, %p138
      %p140 = scmp.ne.s32.totalorder %s128, %s129
      %p141 = scmp.eq.s32.totalorder %s21, 3
      %p142 = por %p140, %p141
      %p144 = scmp.ne.s32.totalorder %s129, %s143
      %p145 = scmp.eq.s32.totalorder %s21, 0
      %p146 = por %p144, %p145
      %s148 = sadd.s32 %s147, 1
      %p151 = scmp.eq.s32.totalorder %s15, 3
      %p152 = scmp.ne.s32.totalorder %s147, %s149
      %p153 = scmp.eq.s32.totalorder %s15, 0
      %p154 = por %p152, %p153
      %p155 = scmp.ne.s32.totalorder %s147, %s149
      %p156 = scmp.eq.s32.totalorder %s20, 3
      %p157 = por %p155, %p156
      %p158 = scmp.ne.s32.totalorder %s149, %s150
      %p159 = scmp.eq.s32.totalorder %s20, 0
      %p160 = por %p158, %p159
      %p161 = scmp.ne.s32.totalorder %s149, %s150
      %p162 = scmp.eq.s32.totalorder %s21, 3
      %p163 = por %p161, %p162
      %p165 = scmp.ne.s32.totalorder %s150, %s164
      %p166 = scmp.eq.s32.totalorder %s21, 0
      %p167 = por %p165, %p166
      %s169 = sadd.s32 %s168, 1
      %p172 = scmp.eq.s32.totalorder %s15, 3
      %p173 = scmp.ne.s32.totalorder %s168, %s170
      %p174 = scmp.eq.s32.totalorder %s15, 0
      %p175 = por %p173, %p174
      %p176 = scmp.ne.s32.totalorder %s168, %s170
      %p177 = scmp.eq.s32.totalorder %s20, 3
      %p178 = por %p176, %p177
      %p179 = scmp.ne.s32.totalorder %s170, %s171
      %p180 = scmp.eq.s32.totalorder %s20, 0
      %p181 = por %p179, %p180
      %p182 = scmp.ne.s32.totalorder %s170, %s171
      %p183 = scmp.eq.s32.totalorder %s21, 3
      %p184 = por %p182, %p183
      %p186 = scmp.ne.s32.totalorder %s171, %s185
      %p187 = scmp.eq.s32.totalorder %s21, 0
      %p188 = por %p186, %p187
      %s190 = sadd.s32 %s189, 1
      %p193 = scmp.eq.s32.totalorder %s15, 3
      %p194 = scmp.ne.s32.totalorder %s189, %s191
      %p195 = scmp.eq.s32.totalorder %s15, 0
      %p196 = por %p194, %p195
      %p197 = scmp.ne.s32.totalorder %s189, %s191
      %p198 = scmp.eq.s32.totalorder %s20, 3
      %p199 = por %p197, %p198
      %p200 = scmp.ne.s32.totalorder %s191, %s192
      %p201 = scmp.eq.s32.totalorder %s20, 0
      %p202 = por %p200, %p201
      %p203 = scmp.ne.s32.totalorder %s191, %s192
      %p204 = scmp.eq.s32.totalorder %s21, 3
      %p205 = por %p203, %p204
      %p207 = scmp.ne.s32.totalorder %s192, %s206
      %p208 = scmp.eq.s32.totalorder %s21, 0
      %p209 = por %p207, %p208
      %s211 = sadd.s32 %s210, 1
      %p214 = scmp.eq.s32.totalorder %s15, 3
      %p215 = scmp.ne.s32.totalorder %s210, %s212
      %p216 = scmp.eq.s32.totalorder %s15, 0
      %p217 = por %p215, %p216
      %p218 = scmp.ne.s32.totalorder %s210, %s212
      %p219 = scmp.eq.s32.totalorder %s20, 3
      %p220 = por %p218, %p219
      %p221 = scmp.ne.s32.totalorder %s212, %s213
      %p222 = scmp.eq.s32.totalorder %s20, 0
      %p223 = por %p221, %p222
      %p224 = scmp.ne.s32.totalorder %s212, %s213
      %p225 = scmp.eq.s32.totalorder %s21, 3
      %p226 = por %p224, %p225
      %p228 = scmp.ne.s32.totalorder %s213, %s227
      %p229 = scmp.eq.s32.totalorder %s21, 0
      %p230 = por %p228, %p229
      %s231 = ssub.s32 %s22, %s34
      %s232 = ssub.s32 %s23, %s30
      %s233 = sor.u32 %s231, %s232
      %p234 = scmp.eq.s32.totalorder %s233, 0
      %s236 = sadd.s32 %s235, 1
      %s237 = scalar_select %p234, %s235, %s236
      %p240 = pneg %p234
      %p241 = scmp.eq.s32.totalorder %s15, 3
      %p242 = por %p240, %p241
      %p243 = scmp.ne.s32.totalorder %s235, %s238
      %p244 = scmp.eq.s32.totalorder %s15, 0
      %p245 = por %p243, %p244
      %p246 = scmp.ne.s32.totalorder %s235, %s238
      %p247 = scmp.eq.s32.totalorder %s20, 3
      %p248 = por %p246, %p247
      %p249 = scmp.ne.s32.totalorder %s238, %s239
      %p250 = scmp.eq.s32.totalorder %s20, 0
      %p251 = por %p249, %p250
      %p252 = scmp.ne.s32.totalorder %s238, %s239
      %p253 = scmp.eq.s32.totalorder %s21, 3
      %p254 = por %p252, %p253
      %p256 = scmp.ne.s32.totalorder %s239, %s255
      %p257 = scmp.eq.s32.totalorder %s21, 0
      %p258 = por %p256, %p257
      %p259 = scmp.le.s32.totalorder 1, %s15
      %p260 = scmp.lt.s32.totalorder %s15, 5
      %p261 = pnand %p259, %p260
      %p262 = pneg %p261
      // Predicated region
      $region9: #{entropy_parameters_pallas.1} parent=5 // pred_check
        _
      $region10: #{entropy_parameters_pallas.1} parent=5 // pred_check_branch
        %264 = sbr.rel (%p261) target = $region12
      $region11: #{entropy_parameters_pallas.1} parent=5 // pred_region
        %s265 = ssub.s32 %s15, 1
        // Predicated region
        $region13: #{entropy_parameters_pallas.1} parent=11 // pred_check
          %p266 = pneg %p76
        $region14: #{entropy_parameters_pallas.1} parent=11 // pred_check_branch
          %268 = sbr.rel (%p266) target = $region16
        $region15: #{entropy_parameters_pallas.1} parent=11 // pred_region
          _
        $region16: #{entropy_parameters_pallas.1} parent=11 // pred_fallthru
          _
        // Predicated region
        $region17: #{entropy_parameters_pallas.1} parent=11 // pred_check
          %p269 = pneg %p97
        $region18: #{entropy_parameters_pallas.1} parent=11 // pred_check_branch
          %271 = sbr.rel (%p269) target = $region20
        $region19: #{entropy_parameters_pallas.1} parent=11 // pred_region
          _
        $region20: #{entropy_parameters_pallas.1} parent=11 // pred_fallthru
          _
        // Predicated region
        $region21: #{entropy_parameters_pallas.1} parent=11 // pred_check
          %p272 = pneg %p118
        $region22: #{entropy_parameters_pallas.1} parent=11 // pred_check_branch
          %274 = sbr.rel (%p272) target = $region24
        $region23: #{entropy_parameters_pallas.1} parent=11 // pred_region
          _
        $region24: #{entropy_parameters_pallas.1} parent=11 // pred_fallthru
          _
        // Predicated region
        $region25: #{entropy_parameters_pallas.1} parent=11 // pred_check
          %p275 = pneg %p139
        $region26: #{entropy_parameters_pallas.1} parent=11 // pred_check_branch
          %277 = sbr.rel (%p275) target = $region28
        $region27: #{entropy_parameters_pallas.1} parent=11 // pred_region
          _
        $region28: #{entropy_parameters_pallas.1} parent=11 // pred_fallthru
          _
        // Predicated region
        $region29: #{entropy_parameters_pallas.1} parent=11 // pred_check
          %p278 = pneg %p160
        $region30: #{entropy_parameters_pallas.1} parent=11 // pred_check_branch
          %280 = sbr.rel (%p278) target = $region32
        $region31: #{entropy_parameters_pallas.1} parent=11 // pred_region
          _
        $region32: #{entropy_parameters_pallas.1} parent=11 // pred_fallthru
          _
        // Predicated region
        $region33: #{entropy_parameters_pallas.1} parent=11 // pred_check
          %p281 = pneg %p181
        $region34: #{entropy_parameters_pallas.1} parent=11 // pred_check_branch
          %283 = sbr.rel (%p281) target = $region36
        $region35: #{entropy_parameters_pallas.1} parent=11 // pred_region
          _
        $region36: #{entropy_parameters_pallas.1} parent=11 // pred_fallthru
          _
        // Predicated region
        $region37: #{entropy_parameters_pallas.1} parent=11 // pred_check
          %p284 = pneg %p202
        $region38: #{entropy_parameters_pallas.1} parent=11 // pred_check_branch
          %286 = sbr.rel (%p284) target = $region40
        $region39: #{entropy_parameters_pallas.1} parent=11 // pred_region
          _
        $region40: #{entropy_parameters_pallas.1} parent=11 // pred_fallthru
          _
        // Predicated region
        $region41: #{entropy_parameters_pallas.1} parent=11 // pred_check
          %p287 = pneg %p223
        $region42: #{entropy_parameters_pallas.1} parent=11 // pred_check_branch
          %289 = sbr.rel (%p287) target = $region44
        $region43: #{entropy_parameters_pallas.1} parent=11 // pred_region
          _
        $region44: #{entropy_parameters_pallas.1} parent=11 // pred_fallthru
          _
      $region12: #{entropy_parameters_pallas.1} parent=5 // pred_fallthru
        _
      %p290 = scmp.lt.s32.totalorder %s15, 4
      // Predicated region
      $region45: #{entropy_parameters_pallas.1} parent=5 // pred_check
        %p291 = pneg %p290
      $region46: #{entropy_parameters_pallas.1} parent=5 // pred_check_branch
        %293 = sbr.rel (%p291) target = $region48
      $region47: #{entropy_parameters_pallas.1} parent=5 // pred_region
        // Predicated region
        $region49: #{entropy_parameters_pallas.1} parent=47 // pred_check
          %p294 = pneg %p49
        $region50: #{entropy_parameters_pallas.1} parent=47 // pred_check_branch
          %296 = sbr.rel (%p294) target = $region52
        $region51: #{entropy_parameters_pallas.1} parent=47 // pred_region
          %s297 = sand.u32 %s39, 1
          %s298 = sand.u32 %s39, 1
          %s299 = smul.addr %s298, 64
          %s300 = scalar_lea.vmem [#allocation2], %s299
          %s301 = smul.addr %s22, 16
          %s302 = sadd.s32 %s23, %s301
          %s303 = smul.addr %s302, 8
          %s304 = scalar_lea.vmem %s0, %s303
          // Predicated region
          $region53: #{entropy_parameters_pallas.1} parent=51 // pred_check
            _
          $region54: #{entropy_parameters_pallas.1} parent=51 // pred_check_branch
            %306 = sbr.rel (0) target = $region56
          $region55: #{entropy_parameters_pallas.1} parent=51 // pred_region
            // Predicated region
            $region57: #{entropy_parameters_pallas.1} parent=55 // pred_check
              _
            $region58: #{entropy_parameters_pallas.1} parent=55 // pred_check_branch
              %308 = sbr.rel (0) target = $region60
            $region59: #{entropy_parameters_pallas.1} parent=55 // pred_region
              // Predicated region
              $region72: #{entropy_parameters_pallas.1} parent=59 // pred_check
                _
              $region73: #{entropy_parameters_pallas.1} parent=59 // pred_check_branch
                %337 = sbr.rel (0) target = $region75
              $region74: #{entropy_parameters_pallas.1} parent=59 // pred_region
                loop: start=0, step=1, limit=1
                $region76: #{entropy_parameters_pallas.1} parent=74 // loop_pre_header
                  _
                $region77: #{entropy_parameters_pallas.1} parent=74 // loop_header
                  %s339 = sphi 0, %s343
                  %p340 = scmp.ge.s32.totalorder %s339, 1
                  %s344 = sphi %s304, %s304
                  %s345 = sphi %s300, %s300
                $region78: #{entropy_parameters_pallas.1} parent=74 // loop_header_branch
                  %342 = sbr.rel (%p340) target = $region82
                $region79: #{entropy_parameters_pallas.1} parent=74 // loop_body
                  %v346 = vld [vmem:[%s344] sm:$0xff]
                  %347 = vst [vmem:[%s345] sm:$0xff] %v346
                  %v348 = vld [vmem:[%s344 + $0x10] sm:$0xff]
                  %349 = vst [vmem:[%s345 + $0x8] sm:$0xff] %v348
                  %v350 = vld [vmem:[%s344 + $0x20] sm:$0xff]
                  %351 = vst [vmem:[%s345 + $0x10] sm:$0xff] %v350
                  %v352 = vld [vmem:[%s344 + $0x30] sm:$0xff]
                  %353 = vst [vmem:[%s345 + $0x18] sm:$0xff] %v352
                  %v354 = vld [vmem:[%s344 + $0x40] sm:$0xff]
                  %355 = vst [vmem:[%s345 + $0x20] sm:$0xff] %v354
                  %v356 = vld [vmem:[%s344 + $0x50] sm:$0xff]
                  %357 = vst [vmem:[%s345 + $0x28] sm:$0xff] %v356
                  %v358 = vld [vmem:[%s344 + $0x60] sm:$0xff]
                  %359 = vst [vmem:[%s345 + $0x30] sm:$0xff] %v358
                  %v360 = vld [vmem:[%s344 + $0x70] sm:$0xff]
                  %361 = vst [vmem:[%s345 + $0x38] sm:$0xff] %v360
                $region80: #{entropy_parameters_pallas.1} parent=74 // loop_footer
                  %s343 = sadd.s32 1, %s339
                $region81: #{entropy_parameters_pallas.1} parent=74 // loop_footer_branch
                  %338 = sbr.rel target = $region77
                $region82: #{entropy_parameters_pallas.1} parent=74 // loop_exit
                  _
              $region75: #{entropy_parameters_pallas.1} parent=59 // pred_fallthru
                _
              // Predicated region
              $region83: #{entropy_parameters_pallas.1} parent=59 // pred_check
                _
              $region84: #{entropy_parameters_pallas.1} parent=59 // pred_check_branch
                %363 = sbr.rel target = $region86
              $region85: #{entropy_parameters_pallas.1} parent=59 // pred_region
                _
              $region86: #{entropy_parameters_pallas.1} parent=59 // pred_fallthru
                _
            $region60: #{entropy_parameters_pallas.1} parent=55 // pred_fallthru
              _
            // Predicated region
            $region61: #{entropy_parameters_pallas.1} parent=55 // pred_check
              _
            $region62: #{entropy_parameters_pallas.1} parent=55 // pred_check_branch
              %310 = sbr.rel target = $region64
            $region63: #{entropy_parameters_pallas.1} parent=55 // pred_region
              loop: start=0, step=1, limit=1
              $region65: #{entropy_parameters_pallas.1} parent=63 // loop_pre_header
                _
              $region66: #{entropy_parameters_pallas.1} parent=63 // loop_header
                %s313 = sphi 0, %s317
                %p314 = scmp.ge.s32.totalorder %s313, 1
                %s318 = sphi %s304, %s304
                %s319 = sphi %s300, %s300
              $region67: #{entropy_parameters_pallas.1} parent=63 // loop_header_branch
                %316 = sbr.rel (%p314) target = $region71
              $region68: #{entropy_parameters_pallas.1} parent=63 // loop_body
                %v320 = vld [vmem:[%s318] sm:$0xff]
                %321 = vst [vmem:[%s319] sm:$0xff] %v320
                %v322 = vld [vmem:[%s318 + $0x10] sm:$0xff]
                %323 = vst [vmem:[%s319 + $0x8] sm:$0xff] %v322
                %v324 = vld [vmem:[%s318 + $0x20] sm:$0xff]
                %325 = vst [vmem:[%s319 + $0x10] sm:$0xff] %v324
                %v326 = vld [vmem:[%s318 + $0x30] sm:$0xff]
                %327 = vst [vmem:[%s319 + $0x18] sm:$0xff] %v326
                %v328 = vld [vmem:[%s318 + $0x40] sm:$0xff]
                %329 = vst [vmem:[%s319 + $0x20] sm:$0xff] %v328
                %v330 = vld [vmem:[%s318 + $0x50] sm:$0xff]
                %331 = vst [vmem:[%s319 + $0x28] sm:$0xff] %v330
                %v332 = vld [vmem:[%s318 + $0x60] sm:$0xff]
                %333 = vst [vmem:[%s319 + $0x30] sm:$0xff] %v332
                %v334 = vld [vmem:[%s318 + $0x70] sm:$0xff]
                %335 = vst [vmem:[%s319 + $0x38] sm:$0xff] %v334
              $region69: #{entropy_parameters_pallas.1} parent=63 // loop_footer
                %s317 = sadd.s32 1, %s313
              $region70: #{entropy_parameters_pallas.1} parent=63 // loop_footer_branch
                %312 = sbr.rel target = $region66
              $region71: #{entropy_parameters_pallas.1} parent=63 // loop_exit
                _
            $region64: #{entropy_parameters_pallas.1} parent=55 // pred_fallthru
              _
          $region56: #{entropy_parameters_pallas.1} parent=51 // pred_fallthru
            _
          %364 = vnop
        $region52: #{entropy_parameters_pallas.1} parent=47 // pred_fallthru
          _
      $region48: #{entropy_parameters_pallas.1} parent=5 // pred_fallthru
        _
      %p365 = scmp.le.s32.totalorder 1, %s15
      %p366 = scmp.lt.s32.totalorder %s15, 5
      %p367 = pnand %p365, %p366
      %p368 = pneg %p367
      // Predicated region
      $region87: #{entropy_parameters_pallas.1} parent=5 // pred_check
        _
      $region88: #{entropy_parameters_pallas.1} parent=5 // pred_check_branch
        %370 = sbr.rel (%p367) target = $region90
      $region89: #{entropy_parameters_pallas.1} parent=5 // pred_region
        %s371 = ssub.s32 %s15, 1
        %s372 = sand.u32 %s42, 1
        %s373 = sand.u32 %s42, 1
        %s374 = smul.addr %s373, 64
        %s375 = scalar_lea.vmem [#allocation2], %s374
        // Predicated region
        $region91: #{entropy_parameters_pallas.1} parent=89 // pred_check
          %p376 = pneg %p55
        $region92: #{entropy_parameters_pallas.1} parent=89 // pred_check_branch
          %378 = sbr.rel (%p376) target = $region94
        $region93: #{entropy_parameters_pallas.1} parent=89 // pred_region
          _
        $region94: #{entropy_parameters_pallas.1} parent=89 // pred_fallthru
          _
        %s379 = sand.u32 %s42, 1
        %s380 = sand.u32 %s42, 1
        %s381 = smul.addr %s380, 64
        %s382 = scalar_lea.vmem [#allocation2], %s381
        %p383 = pneg %p55
        %p384 = pneg %p52
        %p385 = pneg %p76
        %p386 = pneg %p73
        %p387 = pneg %p97
        %p388 = pneg %p94
        %p389 = pneg %p118
        %p390 = pneg %p115
        %p391 = pneg %p139
        %p392 = pneg %p136
        %p393 = pneg %p160
        %p394 = pneg %p157
        %p395 = pneg %p181
        %p396 = pneg %p178
        %p397 = pneg %p202
        %p398 = pneg %p199
        %p399 = pneg %p223
        %p400 = pneg %p220
        %p401 = pneg %p251
        %p402 = pneg %p248
        %s403 = sand.u32 %s238, 1
        %s404 = sand.u32 %s238, 1
        %s405 = smul.addr %s404, 32
        %s406 = scalar_lea.vmem [#allocation3], %s405
        %v412 = vld [vmem:[%s375] sm:$0xff]
        %v413 = vld [vmem:[%s375 + $0x8] sm:$0xff]
        %v414 = vld [vmem:[%s375 + $0x10] sm:$0xff]
        %v415 = vld [vmem:[%s375 + $0x18] sm:$0xff]
        %v416 = vld [vmem:[%s375 + $0x20] sm:$0xff]
        %v417 = vld [vmem:[%s375 + $0x28] sm:$0xff]
        %v418 = vld [vmem:[%s375 + $0x30] sm:$0xff]
        %v419 = vld [vmem:[%s375 + $0x38] sm:$0xff]
        %v420 = vpack.c.bf16 %v413, %v412
        %v421 = vpack.c.bf16 %v415, %v414
        %v422 = vpack.c.bf16 %v417, %v416
        %v423 = vpack.c.bf16 %v419, %v418
        %v424 = vld [vmem:[%s1] sm:$0xf]
        %v425 = vld [vmem:[%s1 + $0x4] sm:$0xf]
        %v426 = vld [vmem:[%s1 + $0x8] sm:$0xf]
        %v427 = vld [vmem:[%s1 + $0xc] sm:$0xf]
        %v428 = vld [vmem:[%s1 + $0x10] sm:$0xf]
        %v429 = vld [vmem:[%s1 + $0x14] sm:$0xf]
        %v430 = vld [vmem:[%s1 + $0x18] sm:$0xf]
        %v431 = vld [vmem:[%s1 + $0x1c] sm:$0xf]
        %v432 = vld [vmem:[%s1 + $0x20] sm:$0xf]
        %v433 = vld [vmem:[%s1 + $0x24] sm:$0xf]
        %v434 = vld [vmem:[%s1 + $0x28] sm:$0xf]
        %v435 = vld [vmem:[%s1 + $0x2c] sm:$0xf]
        %v436 = vld [vmem:[%s1 + $0x30] sm:$0xf]
        %v437 = vld [vmem:[%s1 + $0x34] sm:$0xf]
        %v438 = vld [vmem:[%s1 + $0x38] sm:$0xf]
        %v439 = vld [vmem:[%s1 + $0x3c] sm:$0xf]
        %v440 = vld [vmem:[%s1 + $0x40] sm:$0xf]
        %v441 = vld [vmem:[%s1 + $0x44] sm:$0xf]
        %v442 = vld [vmem:[%s1 + $0x48] sm:$0xf]
        %v443 = vld [vmem:[%s1 + $0x4c] sm:$0xf]
        %v444 = vld [vmem:[%s1 + $0x50] sm:$0xf]
        %v445 = vld [vmem:[%s1 + $0x54] sm:$0xf]
        %v446 = vld [vmem:[%s1 + $0x58] sm:$0xf]
        %v447 = vld [vmem:[%s1 + $0x5c] sm:$0xf]
        %v448 = vld [vmem:[%s1 + $0x60] sm:$0xf]
        %v449 = vld [vmem:[%s1 + $0x64] sm:$0xf]
        %v450 = vld [vmem:[%s1 + $0x68] sm:$0xf]
        %v451 = vld [vmem:[%s1 + $0x6c] sm:$0xf]
        %v452 = vld [vmem:[%s1 + $0x70] sm:$0xf]
        %v453 = vld [vmem:[%s1 + $0x74] sm:$0xf]
        %v454 = vld [vmem:[%s1 + $0x78] sm:$0xf]
        %v455 = vld [vmem:[%s1 + $0x7c] sm:$0xf]
        %v456 = vld [vmem:[%s1 + $0x80] sm:$0xf]
        %v457 = vld [vmem:[%s1 + $0x84] sm:$0xf]
        %v458 = vld [vmem:[%s1 + $0x88] sm:$0xf]
        %v459 = vld [vmem:[%s1 + $0x8c] sm:$0xf]
        %v460 = vld [vmem:[%s1 + $0x90] sm:$0xf]
        %v461 = vld [vmem:[%s1 + $0x94] sm:$0xf]
        %v462 = vld [vmem:[%s1 + $0x98] sm:$0xf]
        %v463 = vld [vmem:[%s1 + $0x9c] sm:$0xf]
        %v464 = vld [vmem:[%s2] sm:$0xff]
        %v465 = vld [vmem:[%s2 + $0x8] sm:$0xff]
        %v466 = vld [vmem:[%s2 + $0x10] sm:$0xff]
        %v467 = vld [vmem:[%s2 + $0x18] sm:$0xff]
        %v468 = vld [vmem:[%s2 + $0x20] sm:$0xff]
        %v469 = vld [vmem:[%s2 + $0x28] sm:$0xff]
        %v470 = vld [vmem:[%s2 + $0x30] sm:$0xff]
        %v471 = vld [vmem:[%s2 + $0x38] sm:$0xff]
        %v472 = vld [vmem:[%s2 + $0x40] sm:$0xff]
        %v473 = vld [vmem:[%s2 + $0x48] sm:$0xff]
        %v474 = vld [vmem:[%s2 + $0x50] sm:$0xff]
        %v475 = vld [vmem:[%s2 + $0x58] sm:$0xff]
        %v476 = vld [vmem:[%s2 + $0x60] sm:$0xff]
        %v477 = vld [vmem:[%s2 + $0x68] sm:$0xff]
        %v478 = vld [vmem:[%s2 + $0x70] sm:$0xff]
        %v479 = vld [vmem:[%s2 + $0x78] sm:$0xff]
        %v480 = vld [vmem:[%s2 + $0x80] sm:$0xff]
        %v481 = vld [vmem:[%s2 + $0x88] sm:$0xff]
        %v482 = vld [vmem:[%s2 + $0x90] sm:$0xff]
        %v483 = vld [vmem:[%s2 + $0x98] sm:$0xff]
        %v484 = vld [vmem:[%s2 + $0xa0] sm:$0xff]
        %v485 = vld [vmem:[%s2 + $0xa8] sm:$0xff]
        %v486 = vld [vmem:[%s2 + $0xb0] sm:$0xff]
        %v487 = vld [vmem:[%s2 + $0xb8] sm:$0xff]
        %v488 = vld [vmem:[%s2 + $0xc0] sm:$0xff]
        %v489 = vld [vmem:[%s2 + $0xc8] sm:$0xff]
        %v490 = vld [vmem:[%s2 + $0xd0] sm:$0xff]
        %v491 = vld [vmem:[%s2 + $0xd8] sm:$0xff]
        %v492 = vld [vmem:[%s2 + $0xe0] sm:$0xff]
        %v493 = vld [vmem:[%s2 + $0xe8] sm:$0xff]
        %v494 = vld [vmem:[%s2 + $0xf0] sm:$0xff]
        %v495 = vld [vmem:[%s2 + $0xf8] sm:$0xff]
        %v496 = vld [vmem:[%s2 + $0x100] sm:$0xff]
        %v497 = vld [vmem:[%s2 + $0x108] sm:$0xff]
        %v498 = vld [vmem:[%s2 + $0x110] sm:$0xff]
        %v499 = vld [vmem:[%s2 + $0x118] sm:$0xff]
        %v500 = vld [vmem:[%s2 + $0x120] sm:$0xff]
        %v501 = vld [vmem:[%s2 + $0x128] sm:$0xff]
        %v502 = vld [vmem:[%s2 + $0x130] sm:$0xff]
        %v503 = vld [vmem:[%s2 + $0x138] sm:$0xff]
        %505 = vset.pattern.permute.xlu0 0
        %506 = vperm.xlu0 %505, %v464
        %v507 = vpop.permute.xlu0 %506
        %510 = vset.pattern.permute.xlu0 0
        %511 = vperm.xlu0 %510, %v465
        %v512 = vpop.permute.xlu0 %511
        %515 = vset.pattern.permute.xlu0 0
        %516 = vperm.xlu0 %515, %v466
        %v517 = vpop.permute.xlu0 %516
        %520 = vset.pattern.permute.xlu0 0
        %521 = vperm.xlu0 %520, %v467
        %v522 = vpop.permute.xlu0 %521
        %525 = vset.pattern.permute.xlu0 0
        %526 = vperm.xlu0 %525, %v468
        %v527 = vpop.permute.xlu0 %526
        %530 = vset.pattern.permute.xlu0 0
        %531 = vperm.xlu0 %530, %v469
        %v532 = vpop.permute.xlu0 %531
        %535 = vset.pattern.permute.xlu0 0
        %536 = vperm.xlu0 %535, %v470
        %v537 = vpop.permute.xlu0 %536
        %540 = vset.pattern.permute.xlu0 0
        %541 = vperm.xlu0 %540, %v471
        %v542 = vpop.permute.xlu0 %541
        %545 = vset.pattern.permute.xlu0 0
        %546 = vperm.xlu0 %545, %v472
        %v547 = vpop.permute.xlu0 %546
        %550 = vset.pattern.permute.xlu0 0
        %551 = vperm.xlu0 %550, %v473
        %v552 = vpop.permute.xlu0 %551
        %555 = vset.pattern.permute.xlu0 0
        %556 = vperm.xlu0 %555, %v474
        %v557 = vpop.permute.xlu0 %556
        %560 = vset.pattern.permute.xlu0 0
        %561 = vperm.xlu0 %560, %v475
        %v562 = vpop.permute.xlu0 %561
        %565 = vset.pattern.permute.xlu0 0
        %566 = vperm.xlu0 %565, %v476
        %v567 = vpop.permute.xlu0 %566
        %570 = vset.pattern.permute.xlu0 0
        %571 = vperm.xlu0 %570, %v477
        %v572 = vpop.permute.xlu0 %571
        %575 = vset.pattern.permute.xlu0 0
        %576 = vperm.xlu0 %575, %v478
        %v577 = vpop.permute.xlu0 %576
        %580 = vset.pattern.permute.xlu0 0
        %581 = vperm.xlu0 %580, %v479
        %v582 = vpop.permute.xlu0 %581
        %585 = vset.pattern.permute.xlu0 0
        %586 = vperm.xlu0 %585, %v480
        %v587 = vpop.permute.xlu0 %586
        %590 = vset.pattern.permute.xlu0 0
        %591 = vperm.xlu0 %590, %v481
        %v592 = vpop.permute.xlu0 %591
        %595 = vset.pattern.permute.xlu0 0
        %596 = vperm.xlu0 %595, %v482
        %v597 = vpop.permute.xlu0 %596
        %600 = vset.pattern.permute.xlu0 0
        %601 = vperm.xlu0 %600, %v483
        %v602 = vpop.permute.xlu0 %601
        %605 = vset.pattern.permute.xlu0 0
        %606 = vperm.xlu0 %605, %v484
        %v607 = vpop.permute.xlu0 %606
        %610 = vset.pattern.permute.xlu0 0
        %611 = vperm.xlu0 %610, %v485
        %v612 = vpop.permute.xlu0 %611
        %615 = vset.pattern.permute.xlu0 0
        %616 = vperm.xlu0 %615, %v486
        %v617 = vpop.permute.xlu0 %616
        %620 = vset.pattern.permute.xlu0 0
        %621 = vperm.xlu0 %620, %v487
        %v622 = vpop.permute.xlu0 %621
        %625 = vset.pattern.permute.xlu0 0
        %626 = vperm.xlu0 %625, %v488
        %v627 = vpop.permute.xlu0 %626
        %630 = vset.pattern.permute.xlu0 0
        %631 = vperm.xlu0 %630, %v489
        %v632 = vpop.permute.xlu0 %631
        %635 = vset.pattern.permute.xlu0 0
        %636 = vperm.xlu0 %635, %v490
        %v637 = vpop.permute.xlu0 %636
        %640 = vset.pattern.permute.xlu0 0
        %641 = vperm.xlu0 %640, %v491
        %v642 = vpop.permute.xlu0 %641
        %645 = vset.pattern.permute.xlu0 0
        %646 = vperm.xlu0 %645, %v492
        %v647 = vpop.permute.xlu0 %646
        %650 = vset.pattern.permute.xlu0 0
        %651 = vperm.xlu0 %650, %v493
        %v652 = vpop.permute.xlu0 %651
        %655 = vset.pattern.permute.xlu0 0
        %656 = vperm.xlu0 %655, %v494
        %v657 = vpop.permute.xlu0 %656
        %660 = vset.pattern.permute.xlu0 0
        %661 = vperm.xlu0 %660, %v495
        %v662 = vpop.permute.xlu0 %661
        %665 = vset.pattern.permute.xlu0 0
        %666 = vperm.xlu0 %665, %v496
        %v667 = vpop.permute.xlu0 %666
        %670 = vset.pattern.permute.xlu0 0
        %671 = vperm.xlu0 %670, %v497
        %v672 = vpop.permute.xlu0 %671
        %675 = vset.pattern.permute.xlu0 0
        %676 = vperm.xlu0 %675, %v498
        %v677 = vpop.permute.xlu0 %676
        %680 = vset.pattern.permute.xlu0 0
        %681 = vperm.xlu0 %680, %v499
        %v682 = vpop.permute.xlu0 %681
        %685 = vset.pattern.permute.xlu0 0
        %686 = vperm.xlu0 %685, %v500
        %v687 = vpop.permute.xlu0 %686
        %690 = vset.pattern.permute.xlu0 0
        %691 = vperm.xlu0 %690, %v501
        %v692 = vpop.permute.xlu0 %691
        %695 = vset.pattern.permute.xlu0 0
        %696 = vperm.xlu0 %695, %v502
        %v697 = vpop.permute.xlu0 %696
        %700 = vset.pattern.permute.xlu0 0
        %701 = vperm.xlu0 %700, %v503
        %v702 = vpop.permute.xlu0 %701
        %v744 = vunpack.c.l.b16 %v424
        %v745 = vunpack.c.l.b16 %v425
        %v746 = vunpack.c.l.b16 %v426
        %v747 = vunpack.c.l.b16 %v427
        %v748 = vunpack.c.l.b16 %v428
        %v749 = vunpack.c.l.b16 %v429
        %v750 = vunpack.c.l.b16 %v430
        %v751 = vunpack.c.l.b16 %v431
        %v752 = vunpack.c.l.b16 %v432
        %v753 = vunpack.c.l.b16 %v433
        %v754 = vunpack.c.l.b16 %v434
        %v755 = vunpack.c.l.b16 %v435
        %v756 = vunpack.c.l.b16 %v436
        %v757 = vunpack.c.l.b16 %v437
        %v758 = vunpack.c.l.b16 %v438
        %v759 = vunpack.c.l.b16 %v439
        %v760 = vunpack.c.l.b16 %v440
        %v761 = vunpack.c.l.b16 %v441
        %v762 = vunpack.c.l.b16 %v442
        %v763 = vunpack.c.l.b16 %v443
        %v764 = vunpack.c.l.b16 %v444
        %v765 = vunpack.c.l.b16 %v445
        %v766 = vunpack.c.l.b16 %v446
        %v767 = vunpack.c.l.b16 %v447
        %v768 = vunpack.c.l.b16 %v448
        %v769 = vunpack.c.l.b16 %v449
        %v770 = vunpack.c.l.b16 %v450
        %v771 = vunpack.c.l.b16 %v451
        %v772 = vunpack.c.l.b16 %v452
        %v773 = vunpack.c.l.b16 %v453
        %v774 = vunpack.c.l.b16 %v454
        %v775 = vunpack.c.l.b16 %v455
        %v776 = vunpack.c.l.b16 %v456
        %v777 = vunpack.c.l.b16 %v457
        %v778 = vunpack.c.l.b16 %v458
        %v779 = vunpack.c.l.b16 %v459
        %v780 = vunpack.c.l.b16 %v460
        %v781 = vunpack.c.l.b16 %v461
        %v782 = vunpack.c.l.b16 %v462
        %v783 = vunpack.c.l.b16 %v463
        %v784 = vpack.c.b16 %v745, %v744
        %v785 = vpack.c.b16 %v747, %v746
        %v786 = vpack.c.b16 %v749, %v748
        %v787 = vpack.c.b16 %v751, %v750
        %v788 = vpack.c.b16 %v753, %v752
        %v789 = vpack.c.b16 %v755, %v754
        %v790 = vpack.c.b16 %v757, %v756
        %v791 = vpack.c.b16 %v759, %v758
        %v792 = vpack.c.b16 %v761, %v760
        %v793 = vpack.c.b16 %v763, %v762
        %v794 = vpack.c.b16 %v765, %v764
        %v795 = vpack.c.b16 %v767, %v766
        %v796 = vpack.c.b16 %v769, %v768
        %v797 = vpack.c.b16 %v771, %v770
        %v798 = vpack.c.b16 %v773, %v772
        %v799 = vpack.c.b16 %v775, %v774
        %v800 = vpack.c.b16 %v777, %v776
        %v801 = vpack.c.b16 %v779, %v778
        %v802 = vpack.c.b16 %v781, %v780
        %v803 = vpack.c.b16 %v783, %v782
        %vm804 = vcmask 523264
        %v806 = vsel %vm804, %v784, 0
        %v809 = vsel %vm804, %v785, 0
        %v812 = vsel %vm804, %v786, 0
        %v815 = vsel %vm804, %v787, 0
        %v818 = vsel %vm804, %v788, 0
        %v821 = vsel %vm804, %v789, 0
        %v824 = vsel %vm804, %v790, 0
        %v827 = vsel %vm804, %v791, 0
        %v830 = vsel %vm804, %v792, 0
        %v833 = vsel %vm804, %v793, 0
        %v836 = vsel %vm804, %v794, 0
        %v839 = vsel %vm804, %v795, 0
        %v842 = vsel %vm804, %v796, 0
        %v845 = vsel %vm804, %v797, 0
        %v848 = vsel %vm804, %v798, 0
        %v851 = vsel %vm804, %v799, 0
        %v854 = vsel %vm804, %v800, 0
        %v857 = vsel %vm804, %v801, 0
        %v860 = vsel %vm804, %v802, 0
        %v863 = vsel %vm804, %v803, 0
        %865 = vmatprep.subr.bf16.mxu0 0
        %866 = vmatpush1.bf16.msra.mxu0 %v420
        %867 = vmatprep.subr.bf16.mxu0 0
        %868 = vmatpush1.bf16.msra.mxu0 %v421
        %869 = vmatprep.subr.bf16.mxu0 0
        %870 = vmatpush1.bf16.msra.mxu0 %v422
        %871 = vmatprep.subr.bf16.mxu0 0
        %872 = vmatpush1.bf16.msra.mxu0 %v423
        %873 = vmatprep.subr.bf16.mxu0 0
        %874 = vmatpush1.bf16.msra.mxu0 0
        %875 = vmatprep.subr.bf16.mxu0 0
        %876 = vmatpush1.bf16.msra.mxu0 0
        %877 = vmatprep.subr.bf16.mxu0 0
        %878 = vmatpush1.bf16.msra.mxu0 0
        %879 = vmatprep.subr.bf16.mxu0 0
        %880 = vmatpush1.bf16.msra.mxu0 0
        %881 = vmatprep.subr.bf16.mxu0 0
        %882 = vmatpush1.bf16.msra.mxu0 0
        %883 = vmatprep.subr.bf16.mxu0 0
        %884 = vmatpush1.bf16.msra.mxu0 0
        %885 = vmatprep.subr.bf16.mxu0 0
        %886 = vmatpush1.bf16.msra.mxu0 0
        %887 = vmatprep.subr.bf16.mxu0 0
        %888 = vmatpush1.bf16.msra.mxu0 0
        %889 = vmatprep.subr.bf16.mxu0 0
        %890 = vmatpush1.bf16.msra.mxu0 0
        %891 = vmatprep.subr.bf16.mxu0 0
        %892 = vmatpush1.bf16.msra.mxu0 0
        %893 = vmatprep.subr.bf16.mxu0 0
        %894 = vmatpush1.bf16.msra.mxu0 0
        %895 = vmatprep.subr.bf16.mxu0 0
        %896 = vmatpush1.bf16.msra.mxu0 0
        %897 = vmatprep.mubr.bf16.mxu0 0
        %898 = vmatmul.mubr.bf16.gmra.mrb[0].mxu0 %v806
        %v899 = vpop.f32.mrb[0].mxu0
        %v900 = vadd.f32 %v507, %v899
        %v901 = vpop.f32.mrb[0].mxu0
        %v902 = vpop.f32.mrb[0].mxu0
        %v903 = vadd.f32 %v512, %v902
        %v904 = vpop.f32.mrb[0].mxu0
        %905 = vmatprep.mubr.bf16.mxu0 0
        %906 = vmatmul.mubr.bf16.gmra.mrb[0].mxu0 %v809
        %v907 = vpop.f32.mrb[0].mxu0
        %v908 = vadd.f32 %v517, %v907
        %v909 = vpop.f32.mrb[0].mxu0
        %v910 = vpop.f32.mrb[0].mxu0
        %v911 = vadd.f32 %v522, %v910
        %v912 = vpop.f32.mrb[0].mxu0
        %913 = vmatprep.mubr.bf16.mxu0 0
        %914 = vmatmul.mubr.bf16.gmra.mrb[0].mxu0 %v812
        %v915 = vpop.f32.mrb[0].mxu0
        %v916 = vadd.f32 %v527, %v915
        %v917 = vpop.f32.mrb[0].mxu0
        %v918 = vpop.f32.mrb[0].mxu0
        %v919 = vadd.f32 %v532, %v918
        %v920 = vpop.f32.mrb[0].mxu0
        %921 = vmatprep.mubr.bf16.mxu0 0
        %922 = vmatmul.mubr.bf16.gmra.mrb[0].mxu0 %v815
        %v923 = vpop.f32.mrb[0].mxu0
        %v924 = vadd.f32 %v537, %v923
        %v925 = vpop.f32.mrb[0].mxu0
        %v926 = vpop.f32.mrb[0].mxu0
        %v927 = vadd.f32 %v542, %v926
        %v928 = vpop.f32.mrb[0].mxu0
        %929 = vmatprep.mubr.bf16.mxu0 0
        %930 = vmatmul.mubr.bf16.gmra.mrb[0].mxu0 %v818
        %v931 = vpop.f32.mrb[0].mxu0
        %v932 = vadd.f32 %v547, %v931
        %v933 = vpop.f32.mrb[0].mxu0
        %v934 = vpop.f32.mrb[0].mxu0
        %v935 = vadd.f32 %v552, %v934
        %v936 = vpop.f32.mrb[0].mxu0
        %937 = vmatprep.mubr.bf16.mxu0 0
        %938 = vmatmul.mubr.bf16.gmra.mrb[0].mxu0 %v821
        %v939 = vpop.f32.mrb[0].mxu0
        %v940 = vadd.f32 %v557, %v939
        %v941 = vpop.f32.mrb[0].mxu0
        %v942 = vpop.f32.mrb[0].mxu0
        %v943 = vadd.f32 %v562, %v942
        %v944 = vpop.f32.mrb[0].mxu0
        %945 = vmatprep.mubr.bf16.mxu0 0
        %946 = vmatmul.mubr.bf16.gmra.mrb[0].mxu0 %v824
        %v947 = vpop.f32.mrb[0].mxu0
        %v948 = vadd.f32 %v567, %v947
        %v949 = vpop.f32.mrb[0].mxu0
        %v950 = vpop.f32.mrb[0].mxu0
        %v951 = vadd.f32 %v572, %v950
        %v952 = vpop.f32.mrb[0].mxu0
        %953 = vmatprep.mubr.bf16.mxu0 0
        %954 = vmatmul.mubr.bf16.gmra.mrb[0].mxu0 %v827
        %v955 = vpop.f32.mrb[0].mxu0
        %v956 = vadd.f32 %v577, %v955
        %v957 = vpop.f32.mrb[0].mxu0
        %v958 = vpop.f32.mrb[0].mxu0
        %v959 = vadd.f32 %v582, %v958
        %v960 = vpop.f32.mrb[0].mxu0
        %961 = vmatprep.mubr.bf16.mxu0 0
        %962 = vmatmul.mubr.bf16.gmra.mrb[0].mxu0 %v830
        %v963 = vpop.f32.mrb[0].mxu0
        %v964 = vadd.f32 %v587, %v963
        %v965 = vpop.f32.mrb[0].mxu0
        %v966 = vpop.f32.mrb[0].mxu0
        %v967 = vadd.f32 %v592, %v966
        %v968 = vpop.f32.mrb[0].mxu0
        %969 = vmatprep.mubr.bf16.mxu0 0
        %970 = vmatmul.mubr.bf16.gmra.mrb[0].mxu0 %v833
        %v971 = vpop.f32.mrb[0].mxu0
        %v972 = vadd.f32 %v597, %v971
        %v973 = vpop.f32.mrb[0].mxu0
        %v974 = vpop.f32.mrb[0].mxu0
        %v975 = vadd.f32 %v602, %v974
        %v976 = vpop.f32.mrb[0].mxu0
        %977 = vmatprep.mubr.bf16.mxu0 0
        %978 = vmatmul.mubr.bf16.gmra.mrb[0].mxu0 %v836
        %v979 = vpop.f32.mrb[0].mxu0
        %v980 = vadd.f32 %v607, %v979
        %v981 = vpop.f32.mrb[0].mxu0
        %v982 = vpop.f32.mrb[0].mxu0
        %v983 = vadd.f32 %v612, %v982
        %v984 = vpop.f32.mrb[0].mxu0
        %985 = vmatprep.mubr.bf16.mxu0 0
        %986 = vmatmul.mubr.bf16.gmra.mrb[0].mxu0 %v839
        %v987 = vpop.f32.mrb[0].mxu0
        %v988 = vadd.f32 %v617, %v987
        %v989 = vpop.f32.mrb[0].mxu0
        %v990 = vpop.f32.mrb[0].mxu0
        %v991 = vadd.f32 %v622, %v990
        %v992 = vpop.f32.mrb[0].mxu0
        %993 = vmatprep.mubr.bf16.mxu0 0
        %994 = vmatmul.mubr.bf16.gmra.mrb[0].mxu0 %v842
        %v995 = vpop.f32.mrb[0].mxu0
        %v996 = vadd.f32 %v627, %v995
        %v997 = vpop.f32.mrb[0].mxu0
        %v998 = vpop.f32.mrb[0].mxu0
        %v999 = vadd.f32 %v632, %v998
        %v1000 = vpop.f32.mrb[0].mxu0
        %1001 = vmatprep.mubr.bf16.mxu0 0
        %1002 = vmatmul.mubr.bf16.gmra.mrb[0].mxu0 %v845
        %v1003 = vpop.f32.mrb[0].mxu0
        %v1004 = vadd.f32 %v637, %v1003
        %v1005 = vpop.f32.mrb[0].mxu0
        %v1006 = vpop.f32.mrb[0].mxu0
        %v1007 = vadd.f32 %v642, %v1006
        %v1008 = vpop.f32.mrb[0].mxu0
        %1009 = vmatprep.mubr.bf16.mxu0 0
        %1010 = vmatmul.mubr.bf16.gmra.mrb[0].mxu0 %v848
        %v1011 = vpop.f32.mrb[0].mxu0
        %v1012 = vadd.f32 %v647, %v1011
        %v1013 = vpop.f32.mrb[0].mxu0
        %v1014 = vpop.f32.mrb[0].mxu0
        %v1015 = vadd.f32 %v652, %v1014
        %v1016 = vpop.f32.mrb[0].mxu0
        %1017 = vmatprep.mubr.bf16.mxu0 0
        %1018 = vmatmul.mubr.bf16.gmra.mrb[0].mxu0 %v851
        %v1019 = vpop.f32.mrb[0].mxu0
        %v1020 = vadd.f32 %v657, %v1019
        %v1021 = vpop.f32.mrb[0].mxu0
        %v1022 = vpop.f32.mrb[0].mxu0
        %v1023 = vadd.f32 %v662, %v1022
        %v1024 = vpop.f32.mrb[0].mxu0
        %1025 = vmatprep.mubr.bf16.mxu0 0
        %1026 = vmatmul.mubr.bf16.gmra.mrb[0].mxu0 %v854
        %v1027 = vpop.f32.mrb[0].mxu0
        %v1028 = vadd.f32 %v667, %v1027
        %v1029 = vpop.f32.mrb[0].mxu0
        %v1030 = vpop.f32.mrb[0].mxu0
        %v1031 = vadd.f32 %v672, %v1030
        %v1032 = vpop.f32.mrb[0].mxu0
        %1033 = vmatprep.mubr.bf16.mxu0 0
        %1034 = vmatmul.mubr.bf16.gmra.mrb[0].mxu0 %v857
        %v1035 = vpop.f32.mrb[0].mxu0
        %v1036 = vadd.f32 %v677, %v1035
        %v1037 = vpop.f32.mrb[0].mxu0
        %v1038 = vpop.f32.mrb[0].mxu0
        %v1039 = vadd.f32 %v682, %v1038
        %v1040 = vpop.f32.mrb[0].mxu0
        %1041 = vmatprep.mubr.bf16.mxu0 0
        %1042 = vmatmul.mubr.bf16.gmra.mrb[0].mxu0 %v860
        %v1043 = vpop.f32.mrb[0].mxu0
        %v1044 = vadd.f32 %v687, %v1043
        %v1045 = vpop.f32.mrb[0].mxu0
        %v1046 = vpop.f32.mrb[0].mxu0
        %v1047 = vadd.f32 %v692, %v1046
        %v1048 = vpop.f32.mrb[0].mxu0
        %1049 = vmatprep.mubr.bf16.mxu0 0
        %1050 = vmatmul.mubr.bf16.gmra.mrb[0].mxu0 %v863
        %v1051 = vpop.f32.mrb[0].mxu0
        %v1052 = vadd.f32 %v697, %v1051
        %v1053 = vpop.f32.mrb[0].mxu0
        %v1054 = vpop.f32.mrb[0].mxu0
        %v1055 = vadd.f32 %v702, %v1054
        %v1056 = vpop.f32.mrb[0].mxu0
        %1057 = vdwg.mxu0
        %v1058 = vpack.c.bf16 %v903, %v900
        %v1059 = vpack.c.bf16 %v911, %v908
        %v1060 = vpack.c.bf16 %v919, %v916
        %v1061 = vpack.c.bf16 %v927, %v924
        %v1062 = vpack.c.bf16 %v935, %v932
        %v1063 = vpack.c.bf16 %v943, %v940
        %v1064 = vpack.c.bf16 %v951, %v948
        %v1065 = vpack.c.bf16 %v959, %v956
        %v1066 = vpack.c.bf16 %v967, %v964
        %v1067 = vpack.c.bf16 %v975, %v972
        %v1068 = vpack.c.bf16 %v983, %v980
        %v1069 = vpack.c.bf16 %v991, %v988
        %v1070 = vpack.c.bf16 %v999, %v996
        %v1071 = vpack.c.bf16 %v1007, %v1004
        %v1072 = vpack.c.bf16 %v1015, %v1012
        %v1073 = vpack.c.bf16 %v1023, %v1020
        %v1074 = vpack.c.bf16 %v1031, %v1028
        %v1075 = vpack.c.bf16 %v1039, %v1036
        %v1076 = vpack.c.bf16 %v1047, %v1044
        %v1077 = vpack.c.bf16 %v1055, %v1052
        %v1078 = vmul.bf16 %v1058, %v1058
        %v1079 = vmul.bf16 %v1059, %v1059
        %v1080 = vmul.bf16 %v1060, %v1060
        %v1081 = vmul.bf16 %v1061, %v1061
        %v1082 = vmul.bf16 %v1062, %v1062
        %v1083 = vmul.bf16 %v1063, %v1063
        %v1084 = vmul.bf16 %v1064, %v1064
        %v1085 = vmul.bf16 %v1065, %v1065
        %v1086 = vmul.bf16 %v1066, %v1066
        %v1087 = vmul.bf16 %v1067, %v1067
        %v1088 = vmul.bf16 %v1068, %v1068
        %v1089 = vmul.bf16 %v1069, %v1069
        %v1090 = vmul.bf16 %v1070, %v1070
        %v1091 = vmul.bf16 %v1071, %v1071
        %v1092 = vmul.bf16 %v1072, %v1072
        %v1093 = vmul.bf16 %v1073, %v1073
        %v1094 = vmul.bf16 %v1074, %v1074
        %v1095 = vmul.bf16 %v1075, %v1075
        %v1096 = vmul.bf16 %v1076, %v1076
        %v1097 = vmul.bf16 %v1077, %v1077
        %v1098 = vmul.bf16 %v1058, %v1078
        %v1099 = vmul.bf16 %v1059, %v1079
        %v1100 = vmul.bf16 %v1060, %v1080
        %v1101 = vmul.bf16 %v1061, %v1081
        %v1102 = vmul.bf16 %v1062, %v1082
        %v1103 = vmul.bf16 %v1063, %v1083
        %v1104 = vmul.bf16 %v1064, %v1084
        %v1105 = vmul.bf16 %v1065, %v1085
        %v1106 = vmul.bf16 %v1066, %v1086
        %v1107 = vmul.bf16 %v1067, %v1087
        %v1108 = vmul.bf16 %v1068, %v1088
        %v1109 = vmul.bf16 %v1069, %v1089
        %v1110 = vmul.bf16 %v1070, %v1090
        %v1111 = vmul.bf16 %v1071, %v1091
        %v1112 = vmul.bf16 %v1072, %v1092
        %v1113 = vmul.bf16 %v1073, %v1093
        %v1114 = vmul.bf16 %v1074, %v1094
        %v1115 = vmul.bf16 %v1075, %v1095
        %v1116 = vmul.bf16 %v1076, %v1096
        %v1117 = vmul.bf16 %v1077, %v1097
        %v1118 = vmul.bf16 %v1098, 1027030327
        %v1119 = vmul.bf16 %v1099, 1027030327
        %v1120 = vmul.bf16 %v1100, 1027030327
        %v1121 = vmul.bf16 %v1101, 1027030327
        %v1122 = vmul.bf16 %v1102, 1027030327
        %v1123 = vmul.bf16 %v1103, 1027030327
        %v1124 = vmul.bf16 %v1104, 1027030327
        %v1125 = vmul.bf16 %v1105, 1027030327
        %v1126 = vmul.bf16 %v1106, 1027030327
        %v1127 = vmul.bf16 %v1107, 1027030327
        %v1128 = vmul.bf16 %v1108, 1027030327
        %v1129 = vmul.bf16 %v1109, 1027030327
        %v1130 = vmul.bf16 %v1110, 1027030327
        %v1131 = vmul.bf16 %v1111, 1027030327
        %v1132 = vmul.bf16 %v1112, 1027030327
        %v1133 = vmul.bf16 %v1113, 1027030327
        %v1134 = vmul.bf16 %v1114, 1027030327
        %v1135 = vmul.bf16 %v1115, 1027030327
        %v1136 = vmul.bf16 %v1116, 1027030327
        %v1137 = vmul.bf16 %v1117, 1027030327
        %v1138 = vadd.bf16 %v1058, %v1118
        %v1139 = vadd.bf16 %v1059, %v1119
        %v1140 = vadd.bf16 %v1060, %v1120
        %v1141 = vadd.bf16 %v1061, %v1121
        %v1142 = vadd.bf16 %v1062, %v1122
        %v1143 = vadd.bf16 %v1063, %v1123
        %v1144 = vadd.bf16 %v1064, %v1124
        %v1145 = vadd.bf16 %v1065, %v1125
        %v1146 = vadd.bf16 %v1066, %v1126
        %v1147 = vadd.bf16 %v1067, %v1127
        %v1148 = vadd.bf16 %v1068, %v1128
        %v1149 = vadd.bf16 %v1069, %v1129
        %v1150 = vadd.bf16 %v1070, %v1130
        %v1151 = vadd.bf16 %v1071, %v1131
        %v1152 = vadd.bf16 %v1072, %v1132
        %v1153 = vadd.bf16 %v1073, %v1133
        %v1154 = vadd.bf16 %v1074, %v1134
        %v1155 = vadd.bf16 %v1075, %v1135
        %v1156 = vadd.bf16 %v1076, %v1136
        %v1157 = vadd.bf16 %v1077, %v1137
        %v1158 = vmul.bf16 %v1138, 1061961548
        %v1159 = vmul.bf16 %v1139, 1061961548
        %v1160 = vmul.bf16 %v1140, 1061961548
        %v1161 = vmul.bf16 %v1141, 1061961548
        %v1162 = vmul.bf16 %v1142, 1061961548
        %v1163 = vmul.bf16 %v1143, 1061961548
        %v1164 = vmul.bf16 %v1144, 1061961548
        %v1165 = vmul.bf16 %v1145, 1061961548
        %v1166 = vmul.bf16 %v1146, 1061961548
        %v1167 = vmul.bf16 %v1147, 1061961548
        %v1168 = vmul.bf16 %v1148, 1061961548
        %v1169 = vmul.bf16 %v1149, 1061961548
        %v1170 = vmul.bf16 %v1150, 1061961548
        %v1171 = vmul.bf16 %v1151, 1061961548
        %v1172 = vmul.bf16 %v1152, 1061961548
        %v1173 = vmul.bf16 %v1153, 1061961548
        %v1174 = vmul.bf16 %v1154, 1061961548
        %v1175 = vmul.bf16 %v1155, 1061961548
        %v1176 = vmul.bf16 %v1156, 1061961548
        %v1177 = vmul.bf16 %v1157, 1061961548
        %v1178 = vtanh.bf16.pop %v1158
        %v1179 = vtanh.bf16.pop %v1159
        %v1180 = vtanh.bf16.pop %v1160
        %v1181 = vtanh.bf16.pop %v1161
        %v1182 = vtanh.bf16.pop %v1162
        %v1183 = vtanh.bf16.pop %v1163
        %v1184 = vtanh.bf16.pop %v1164
        %v1185 = vtanh.bf16.pop %v1165
        %v1186 = vtanh.bf16.pop %v1166
        %v1187 = vtanh.bf16.pop %v1167
        %v1188 = vtanh.bf16.pop %v1168
        %v1189 = vtanh.bf16.pop %v1169
        %v1190 = vtanh.bf16.pop %v1170
        %v1191 = vtanh.bf16.pop %v1171
        %v1192 = vtanh.bf16.pop %v1172
        %v1193 = vtanh.bf16.pop %v1173
        %v1194 = vtanh.bf16.pop %v1174
        %v1195 = vtanh.bf16.pop %v1175
        %v1196 = vtanh.bf16.pop %v1176
        %v1197 = vtanh.bf16.pop %v1177
        %v1198 = vadd.bf16 %v1178, 1065369472
        %v1199 = vadd.bf16 %v1179, 1065369472
        %v1200 = vadd.bf16 %v1180, 1065369472
        %v1201 = vadd.bf16 %v1181, 1065369472
        %v1202 = vadd.bf16 %v1182, 1065369472
        %v1203 = vadd.bf16 %v1183, 1065369472
        %v1204 = vadd.bf16 %v1184, 1065369472
        %v1205 = vadd.bf16 %v1185, 1065369472
        %v1206 = vadd.bf16 %v1186, 1065369472
        %v1207 = vadd.bf16 %v1187, 1065369472
        %v1208 = vadd.bf16 %v1188, 1065369472
        %v1209 = vadd.bf16 %v1189, 1065369472
        %v1210 = vadd.bf16 %v1190, 1065369472
        %v1211 = vadd.bf16 %v1191, 1065369472
        %v1212 = vadd.bf16 %v1192, 1065369472
        %v1213 = vadd.bf16 %v1193, 1065369472
        %v1214 = vadd.bf16 %v1194, 1065369472
        %v1215 = vadd.bf16 %v1195, 1065369472
        %v1216 = vadd.bf16 %v1196, 1065369472
        %v1217 = vadd.bf16 %v1197, 1065369472
        %v1218 = vmul.bf16 %v1198, 1056980736
        %v1219 = vmul.bf16 %v1199, 1056980736
        %v1220 = vmul.bf16 %v1200, 1056980736
        %v1221 = vmul.bf16 %v1201, 1056980736
        %v1222 = vmul.bf16 %v1202, 1056980736
        %v1223 = vmul.bf16 %v1203, 1056980736
        %v1224 = vmul.bf16 %v1204, 1056980736
        %v1225 = vmul.bf16 %v1205, 1056980736
        %v1226 = vmul.bf16 %v1206, 1056980736
        %v1227 = vmul.bf16 %v1207, 1056980736
        %v1228 = vmul.bf16 %v1208, 1056980736
        %v1229 = vmul.bf16 %v1209, 1056980736
        %v1230 = vmul.bf16 %v1210, 1056980736
        %v1231 = vmul.bf16 %v1211, 1056980736
        %v1232 = vmul.bf16 %v1212, 1056980736
        %v1233 = vmul.bf16 %v1213, 1056980736
        %v1234 = vmul.bf16 %v1214, 1056980736
        %v1235 = vmul.bf16 %v1215, 1056980736
        %v1236 = vmul.bf16 %v1216, 1056980736
        %v1237 = vmul.bf16 %v1217, 1056980736
        %v1238 = vmul.bf16 %v1058, %v1218
        %v1239 = vmul.bf16 %v1059, %v1219
        %v1240 = vmul.bf16 %v1060, %v1220
        %v1241 = vmul.bf16 %v1061, %v1221
        %v1242 = vmul.bf16 %v1062, %v1222
        %v1243 = vmul.bf16 %v1063, %v1223
        %v1244 = vmul.bf16 %v1064, %v1224
        %v1245 = vmul.bf16 %v1065, %v1225
        %v1246 = vmul.bf16 %v1066, %v1226
        %v1247 = vmul.bf16 %v1067, %v1227
        %v1248 = vmul.bf16 %v1068, %v1228
        %v1249 = vmul.bf16 %v1069, %v1229
        %v1250 = vmul.bf16 %v1070, %v1230
        %v1251 = vmul.bf16 %v1071, %v1231
        %v1252 = vmul.bf16 %v1072, %v1232
        %v1253 = vmul.bf16 %v1073, %v1233
        %v1254 = vmul.bf16 %v1074, %v1234
        %v1255 = vmul.bf16 %v1075, %v1235
        %v1256 = vmul.bf16 %v1076, %v1236
        %v1257 = vmul.bf16 %v1077, %v1237
        %v1258 = vld [vmem:[%s3] sm:$0xff]
        %v1259 = vld [vmem:[%s3 + $0x8] sm:$0xf]
        %v1260 = vld [vmem:[%s3 + $0xc] sm:$0xff]
        %v1261 = vld [vmem:[%s3 + $0x14] sm:$0xf]
        %v1262 = vld [vmem:[%s3 + $0x18] sm:$0xff]
        %v1263 = vld [vmem:[%s3 + $0x20] sm:$0xf]
        %v1264 = vld [vmem:[%s3 + $0x24] sm:$0xff]
        %v1265 = vld [vmem:[%s3 + $0x2c] sm:$0xf]
        %v1266 = vld [vmem:[%s3 + $0x30] sm:$0xff]
        %v1267 = vld [vmem:[%s3 + $0x38] sm:$0xf]
        %v1268 = vld [vmem:[%s3 + $0x3c] sm:$0xff]
        %v1269 = vld [vmem:[%s3 + $0x44] sm:$0xf]
        %v1270 = vld [vmem:[%s3 + $0x48] sm:$0xff]
        %v1271 = vld [vmem:[%s3 + $0x50] sm:$0xf]
        %v1272 = vld [vmem:[%s3 + $0x54] sm:$0xff]
        %v1273 = vld [vmem:[%s3 + $0x5c] sm:$0xf]
        %v1274 = vld [vmem:[%s3 + $0x60] sm:$0xff]
        %v1275 = vld [vmem:[%s3 + $0x68] sm:$0xf]
        %v1276 = vld [vmem:[%s3 + $0x6c] sm:$0xff]
        %v1277 = vld [vmem:[%s3 + $0x74] sm:$0xf]
        %v1278 = vld [vmem:[%s3 + $0x78] sm:$0xff]
        %v1279 = vld [vmem:[%s3 + $0x80] sm:$0xf]
        %v1280 = vld [vmem:[%s3 + $0x84] sm:$0xff]
        %v1281 = vld [vmem:[%s3 + $0x8c] sm:$0xf]
        %v1282 = vld [vmem:[%s3 + $0x90] sm:$0xff]
        %v1283 = vld [vmem:[%s3 + $0x98] sm:$0xf]
        %v1284 = vld [vmem:[%s3 + $0x9c] sm:$0xff]
        %v1285 = vld [vmem:[%s3 + $0xa4] sm:$0xf]
        %v1286 = vld [vmem:[%s3 + $0xa8] sm:$0xff]
        %v1287 = vld [vmem:[%s3 + $0xb0] sm:$0xf]
        %v1288 = vld [vmem:[%s3 + $0xb4] sm:$0xff]
        %v1289 = vld [vmem:[%s3 + $0xbc] sm:$0xf]
        %v1290 = vld [vmem:[%s3 + $0xc0] sm:$0xff]
        %v1291 = vld [vmem:[%s3 + $0xc8] sm:$0xf]
        %v1292 = vld [vmem:[%s3 + $0xcc] sm:$0xff]
        %v1293 = vld [vmem:[%s3 + $0xd4] sm:$0xf]
        %v1294 = vld [vmem:[%s3 + $0xd8] sm:$0xff]
        %v1295 = vld [vmem:[%s3 + $0xe0] sm:$0xf]
        %v1296 = vld [vmem:[%s3 + $0xe4] sm:$0xff]
        %v1297 = vld [vmem:[%s3 + $0xec] sm:$0xf]
        %v1298 = vld [vmem:[%s3 + $0xf0] sm:$0xff]
        %v1299 = vld [vmem:[%s3 + $0xf8] sm:$0xf]
        %v1300 = vld [vmem:[%s3 + $0xfc] sm:$0xff]
        %v1301 = vld [vmem:[%s3 + $0x104] sm:$0xf]
        %v1302 = vld [vmem:[%s3 + $0x108] sm:$0xff]
        %v1303 = vld [vmem:[%s3 + $0x110] sm:$0xf]
        %v1304 = vld [vmem:[%s3 + $0x114] sm:$0xff]
        %v1305 = vld [vmem:[%s3 + $0x11c] sm:$0xf]
        %v1306 = vld [vmem:[%s3 + $0x120] sm:$0xff]
        %v1307 = vld [vmem:[%s3 + $0x128] sm:$0xf]
        %v1308 = vld [vmem:[%s3 + $0x12c] sm:$0xff]
        %v1309 = vld [vmem:[%s3 + $0x134] sm:$0xf]
        %v1310 = vld [vmem:[%s3 + $0x138] sm:$0xff]
        %v1311 = vld [vmem:[%s3 + $0x140] sm:$0xf]
        %v1312 = vld [vmem:[%s3 + $0x144] sm:$0xff]
        %v1313 = vld [vmem:[%s3 + $0x14c] sm:$0xf]
        %v1314 = vld [vmem:[%s3 + $0x150] sm:$0xff]
        %v1315 = vld [vmem:[%s3 + $0x158] sm:$0xf]
        %v1316 = vld [vmem:[%s3 + $0x15c] sm:$0xff]
        %v1317 = vld [vmem:[%s3 + $0x164] sm:$0xf]
        %v1318 = vld [vmem:[%s3 + $0x168] sm:$0xff]
        %v1319 = vld [vmem:[%s3 + $0x170] sm:$0xf]
        %v1320 = vld [vmem:[%s3 + $0x174] sm:$0xff]
        %v1321 = vld [vmem:[%s3 + $0x17c] sm:$0xf]
        %v1322 = vld [vmem:[%s4] sm:$0xff]
        %v1323 = vld [vmem:[%s4 + $0x8] sm:$0xff]
        %v1324 = vld [vmem:[%s4 + $0x10] sm:$0xff]
        %v1325 = vld [vmem:[%s4 + $0x18] sm:$0xff]
        %v1326 = vld [vmem:[%s4 + $0x20] sm:$0xff]
        %v1327 = vld [vmem:[%s4 + $0x28] sm:$0xff]
        %v1328 = vld [vmem:[%s4 + $0x30] sm:$0xff]
        %v1329 = vld [vmem:[%s4 + $0x38] sm:$0xff]
        %v1330 = vld [vmem:[%s4 + $0x40] sm:$0xff]
        %v1331 = vld [vmem:[%s4 + $0x48] sm:$0xff]
        %v1332 = vld [vmem:[%s4 + $0x50] sm:$0xff]
        %v1333 = vld [vmem:[%s4 + $0x58] sm:$0xff]
        %v1334 = vld [vmem:[%s4 + $0x60] sm:$0xff]
        %v1335 = vld [vmem:[%s4 + $0x68] sm:$0xff]
        %v1336 = vld [vmem:[%s4 + $0x70] sm:$0xff]
        %v1337 = vld [vmem:[%s4 + $0x78] sm:$0xff]
        %v1338 = vld [vmem:[%s4 + $0x80] sm:$0xff]
        %v1339 = vld [vmem:[%s4 + $0x88] sm:$0xff]
        %v1340 = vld [vmem:[%s4 + $0x90] sm:$0xff]
        %v1341 = vld [vmem:[%s4 + $0x98] sm:$0xff]
        %v1342 = vld [vmem:[%s4 + $0xa0] sm:$0xff]
        %v1343 = vld [vmem:[%s4 + $0xa8] sm:$0xff]
        %v1344 = vld [vmem:[%s4 + $0xb0] sm:$0xff]
        %v1345 = vld [vmem:[%s4 + $0xb8] sm:$0xff]
        %v1346 = vld [vmem:[%s4 + $0xc0] sm:$0xff]
        %v1347 = vld [vmem:[%s4 + $0xc8] sm:$0xff]
        %v1348 = vld [vmem:[%s4 + $0xd0] sm:$0xff]
        %v1349 = vld [vmem:[%s4 + $0xd8] sm:$0xff]
        %v1350 = vld [vmem:[%s4 + $0xe0] sm:$0xff]
        %v1351 = vld [vmem:[%s4 + $0xe8] sm:$0xff]
        %v1352 = vld [vmem:[%s4 + $0xf0] sm:$0xff]
        %v1353 = vld [vmem:[%s4 + $0xf8] sm:$0xff]
        %1355 = vset.pattern.permute.xlu0 0
        %1356 = vperm.xlu0 %1355, %v1322
        %v1357 = vpop.permute.xlu0 %1356
        %1360 = vset.pattern.permute.xlu0 0
        %1361 = vperm.xlu0 %1360, %v1323
        %v1362 = vpop.permute.xlu0 %1361
        %1365 = vset.pattern.permute.xlu0 0
        %1366 = vperm.xlu0 %1365, %v1324
        %v1367 = vpop.permute.xlu0 %1366
        %1370 = vset.pattern.permute.xlu0 0
        %1371 = vperm.xlu0 %1370, %v1325
        %v1372 = vpop.permute.xlu0 %1371
        %1375 = vset.pattern.permute.xlu0 0
        %1376 = vperm.xlu0 %1375, %v1326
        %v1377 = vpop.permute.xlu0 %1376
        %1380 = vset.pattern.permute.xlu0 0
        %1381 = vperm.xlu0 %1380, %v1327
        %v1382 = vpop.permute.xlu0 %1381
        %1385 = vset.pattern.permute.xlu0 0
        %1386 = vperm.xlu0 %1385, %v1328
        %v1387 = vpop.permute.xlu0 %1386
        %1390 = vset.pattern.permute.xlu0 0
        %1391 = vperm.xlu0 %1390, %v1329
        %v1392 = vpop.permute.xlu0 %1391
        %1395 = vset.pattern.permute.xlu0 0
        %1396 = vperm.xlu0 %1395, %v1330
        %v1397 = vpop.permute.xlu0 %1396
        %1400 = vset.pattern.permute.xlu0 0
        %1401 = vperm.xlu0 %1400, %v1331
        %v1402 = vpop.permute.xlu0 %1401
        %1405 = vset.pattern.permute.xlu0 0
        %1406 = vperm.xlu0 %1405, %v1332
        %v1407 = vpop.permute.xlu0 %1406
        %1410 = vset.pattern.permute.xlu0 0
        %1411 = vperm.xlu0 %1410, %v1333
        %v1412 = vpop.permute.xlu0 %1411
        %1415 = vset.pattern.permute.xlu0 0
        %1416 = vperm.xlu0 %1415, %v1334
        %v1417 = vpop.permute.xlu0 %1416
        %1420 = vset.pattern.permute.xlu0 0
        %1421 = vperm.xlu0 %1420, %v1335
        %v1422 = vpop.permute.xlu0 %1421
        %1425 = vset.pattern.permute.xlu0 0
        %1426 = vperm.xlu0 %1425, %v1336
        %v1427 = vpop.permute.xlu0 %1426
        %1430 = vset.pattern.permute.xlu0 0
        %1431 = vperm.xlu0 %1430, %v1337
        %v1432 = vpop.permute.xlu0 %1431
        %1435 = vset.pattern.permute.xlu0 0
        %1436 = vperm.xlu0 %1435, %v1338
        %v1437 = vpop.permute.xlu0 %1436
        %1440 = vset.pattern.permute.xlu0 0
        %1441 = vperm.xlu0 %1440, %v1339
        %v1442 = vpop.permute.xlu0 %1441
        %1445 = vset.pattern.permute.xlu0 0
        %1446 = vperm.xlu0 %1445, %v1340
        %v1447 = vpop.permute.xlu0 %1446
        %1450 = vset.pattern.permute.xlu0 0
        %1451 = vperm.xlu0 %1450, %v1341
        %v1452 = vpop.permute.xlu0 %1451
        %1455 = vset.pattern.permute.xlu0 0
        %1456 = vperm.xlu0 %1455, %v1342
        %v1457 = vpop.permute.xlu0 %1456
        %1460 = vset.pattern.permute.xlu0 0
        %1461 = vperm.xlu0 %1460, %v1343
        %v1462 = vpop.permute.xlu0 %1461
        %1465 = vset.pattern.permute.xlu0 0
        %1466 = vperm.xlu0 %1465, %v1344
        %v1467 = vpop.permute.xlu0 %1466
        %1470 = vset.pattern.permute.xlu0 0
        %1471 = vperm.xlu0 %1470, %v1345
        %v1472 = vpop.permute.xlu0 %1471
        %1475 = vset.pattern.permute.xlu0 0
        %1476 = vperm.xlu0 %1475, %v1346
        %v1477 = vpop.permute.xlu0 %1476
        %1480 = vset.pattern.permute.xlu0 0
        %1481 = vperm.xlu0 %1480, %v1347
        %v1482 = vpop.permute.xlu0 %1481
        %1485 = vset.pattern.permute.xlu0 0
        %1486 = vperm.xlu0 %1485, %v1348
        %v1487 = vpop.permute.xlu0 %1486
        %1490 = vset.pattern.permute.xlu0 0
        %1491 = vperm.xlu0 %1490, %v1349
        %v1492 = vpop.permute.xlu0 %1491
        %1495 = vset.pattern.permute.xlu0 0
        %1496 = vperm.xlu0 %1495, %v1350
        %v1497 = vpop.permute.xlu0 %1496
        %1500 = vset.pattern.permute.xlu0 0
        %1501 = vperm.xlu0 %1500, %v1351
        %v1502 = vpop.permute.xlu0 %1501
        %1505 = vset.pattern.permute.xlu0 0
        %1506 = vperm.xlu0 %1505, %v1352
        %v1507 = vpop.permute.xlu0 %1506
        %1510 = vset.pattern.permute.xlu0 0
        %1511 = vperm.xlu0 %1510, %v1353
        %v1512 = vpop.permute.xlu0 %1511
        %v1578 = vunpack.c.l.b16 %v1258
        %v1579 = vunpack.c.h.b16 %v1258
        %v1580 = vunpack.c.l.b16 %v1259
        %v1581 = vunpack.c.l.b16 %v1260
        %v1582 = vunpack.c.h.b16 %v1260
        %v1583 = vunpack.c.l.b16 %v1261
        %v1584 = vunpack.c.l.b16 %v1262
        %v1585 = vunpack.c.h.b16 %v1262
        %v1586 = vunpack.c.l.b16 %v1263
        %v1587 = vunpack.c.l.b16 %v1264
        %v1588 = vunpack.c.h.b16 %v1264
        %v1589 = vunpack.c.l.b16 %v1265
        %v1590 = vunpack.c.l.b16 %v1266
        %v1591 = vunpack.c.h.b16 %v1266
        %v1592 = vunpack.c.l.b16 %v1267
        %v1593 = vunpack.c.l.b16 %v1268
        %v1594 = vunpack.c.h.b16 %v1268
        %v1595 = vunpack.c.l.b16 %v1269
        %v1596 = vunpack.c.l.b16 %v1270
        %v1597 = vunpack.c.h.b16 %v1270
        %v1598 = vunpack.c.l.b16 %v1271
        %v1599 = vunpack.c.l.b16 %v1272
        %v1600 = vunpack.c.h.b16 %v1272
        %v1601 = vunpack.c.l.b16 %v1273
        %v1602 = vunpack.c.l.b16 %v1274
        %v1603 = vunpack.c.h.b16 %v1274
        %v1604 = vunpack.c.l.b16 %v1275
        %v1605 = vunpack.c.l.b16 %v1276
        %v1606 = vunpack.c.h.b16 %v1276
        %v1607 = vunpack.c.l.b16 %v1277
        %v1608 = vunpack.c.l.b16 %v1278
        %v1609 = vunpack.c.h.b16 %v1278
        %v1610 = vunpack.c.l.b16 %v1279
        %v1611 = vunpack.c.l.b16 %v1280
        %v1612 = vunpack.c.h.b16 %v1280
        %v1613 = vunpack.c.l.b16 %v1281
        %v1614 = vunpack.c.l.b16 %v1282
        %v1615 = vunpack.c.h.b16 %v1282
        %v1616 = vunpack.c.l.b16 %v1283
        %v1617 = vunpack.c.l.b16 %v1284
        %v1618 = vunpack.c.h.b16 %v1284
        %v1619 = vunpack.c.l.b16 %v1285
        %v1620 = vunpack.c.l.b16 %v1286
        %v1621 = vunpack.c.h.b16 %v1286
        %v1622 = vunpack.c.l.b16 %v1287
        %v1623 = vunpack.c.l.b16 %v1288
        %v1624 = vunpack.c.h.b16 %v1288
        %v1625 = vunpack.c.l.b16 %v1289
        %v1626 = vunpack.c.l.b16 %v1290
        %v1627 = vunpack.c.h.b16 %v1290
        %v1628 = vunpack.c.l.b16 %v1291
        %v1629 = vunpack.c.l.b16 %v1292
        %v1630 = vunpack.c.h.b16 %v1292
        %v1631 = vunpack.c.l.b16 %v1293
        %v1632 = vunpack.c.l.b16 %v1294
        %v1633 = vunpack.c.h.b16 %v1294
        %v1634 = vunpack.c.l.b16 %v1295
        %v1635 = vunpack.c.l.b16 %v1296
        %v1636 = vunpack.c.h.b16 %v1296
        %v1637 = vunpack.c.l.b16 %v1297
        %v1638 = vunpack.c.l.b16 %v1298
        %v1639 = vunpack.c.h.b16 %v1298
        %v1640 = vunpack.c.l.b16 %v1299
        %v1641 = vunpack.c.l.b16 %v1300
        %v1642 = vunpack.c.h.b16 %v1300
        %v1643 = vunpack.c.l.b16 %v1301
        %v1644 = vunpack.c.l.b16 %v1302
        %v1645 = vunpack.c.h.b16 %v1302
        %v1646 = vunpack.c.l.b16 %v1303
        %v1647 = vunpack.c.l.b16 %v1304
        %v1648 = vunpack.c.h.b16 %v1304
        %v1649 = vunpack.c.l.b16 %v1305
        %v1650 = vunpack.c.l.b16 %v1306
        %v1651 = vunpack.c.h.b16 %v1306
        %v1652 = vunpack.c.l.b16 %v1307
        %v1653 = vunpack.c.l.b16 %v1308
        %v1654 = vunpack.c.h.b16 %v1308
        %v1655 = vunpack.c.l.b16 %v1309
        %v1656 = vunpack.c.l.b16 %v1310
        %v1657 = vunpack.c.h.b16 %v1310
        %v1658 = vunpack.c.l.b16 %v1311
        %v1659 = vunpack.c.l.b16 %v1312
        %v1660 = vunpack.c.h.b16 %v1312
        %v1661 = vunpack.c.l.b16 %v1313
        %v1662 = vunpack.c.l.b16 %v1314
        %v1663 = vunpack.c.h.b16 %v1314
        %v1664 = vunpack.c.l.b16 %v1315
        %v1665 = vunpack.c.l.b16 %v1316
        %v1666 = vunpack.c.h.b16 %v1316
        %v1667 = vunpack.c.l.b16 %v1317
        %v1668 = vunpack.c.l.b16 %v1318
        %v1669 = vunpack.c.h.b16 %v1318
        %v1670 = vunpack.c.l.b16 %v1319
        %v1671 = vunpack.c.l.b16 %v1320
        %v1672 = vunpack.c.h.b16 %v1320
        %v1673 = vunpack.c.l.b16 %v1321
        %v1674 = vpack.c.b16 %v1581, %v1578
        %v1675 = vpack.c.b16 %v1582, %v1579
        %v1676 = vpack.c.b16 %v1583, %v1580
        %v1677 = vpack.c.b16 %v1587, %v1584
        %v1678 = vpack.c.b16 %v1588, %v1585
        %v1679 = vpack.c.b16 %v1589, %v1586
        %v1680 = vpack.c.b16 %v1593, %v1590
        %v1681 = vpack.c.b16 %v1594, %v1591
        %v1682 = vpack.c.b16 %v1595, %v1592
        %v1683 = vpack.c.b16 %v1599, %v1596
        %v1684 = vpack.c.b16 %v1600, %v1597
        %v1685 = vpack.c.b16 %v1601, %v1598
        %v1686 = vpack.c.b16 %v1605, %v1602
        %v1687 = vpack.c.b16 %v1606, %v1603
        %v1688 = vpack.c.b16 %v1607, %v1604
        %v1689 = vpack.c.b16 %v1611, %v1608
        %v1690 = vpack.c.b16 %v1612, %v1609
        %v1691 = vpack.c.b16 %v1613, %v1610
        %v1692 = vpack.c.b16 %v1617, %v1614
        %v1693 = vpack.c.b16 %v1618, %v1615
        %v1694 = vpack.c.b16 %v1619, %v1616
        %v1695 = vpack.c.b16 %v1623, %v1620
        %v1696 = vpack.c.b16 %v1624, %v1621
        %v1697 = vpack.c.b16 %v1625, %v1622
        %v1698 = vpack.c.b16 %v1629, %v1626
        %v1699 = vpack.c.b16 %v1630, %v1627
        %v1700 = vpack.c.b16 %v1631, %v1628
        %v1701 = vpack.c.b16 %v1635, %v1632
        %v1702 = vpack.c.b16 %v1636, %v1633
        %v1703 = vpack.c.b16 %v1637, %v1634
        %v1704 = vpack.c.b16 %v1641, %v1638
        %v1705 = vpack.c.b16 %v1642, %v1639
        %v1706 = vpack.c.b16 %v1643, %v1640
        %v1707 = vpack.c.b16 %v1647, %v1644
        %v1708 = vpack.c.b16 %v1648, %v1645
        %v1709 = vpack.c.b16 %v1649, %v1646
        %v1710 = vpack.c.b16 %v1653, %v1650
        %v1711 = vpack.c.b16 %v1654, %v1651
        %v1712 = vpack.c.b16 %v1655, %v1652
        %v1713 = vpack.c.b16 %v1659, %v1656
        %v1714 = vpack.c.b16 %v1660, %v1657
        %v1715 = vpack.c.b16 %v1661, %v1658
        %v1716 = vpack.c.b16 %v1665, %v1662
        %v1717 = vpack.c.b16 %v1666, %v1663
        %v1718 = vpack.c.b16 %v1667, %v1664
        %v1719 = vpack.c.b16 %v1671, %v1668
        %v1720 = vpack.c.b16 %v1672, %v1669
        %v1721 = vpack.c.b16 %v1673, %v1670
        %v1755 = vsel %vm804, %v1676, 0
        %v1758 = vsel %vm804, %v1679, 0
        %v1761 = vsel %vm804, %v1682, 0
        %v1764 = vsel %vm804, %v1685, 0
        %v1767 = vsel %vm804, %v1688, 0
        %v1770 = vsel %vm804, %v1691, 0
        %v1773 = vsel %vm804, %v1694, 0
        %v1776 = vsel %vm804, %v1697, 0
        %v1779 = vsel %vm804, %v1700, 0
        %v1782 = vsel %vm804, %v1703, 0
        %v1785 = vsel %vm804, %v1706, 0
        %v1788 = vsel %vm804, %v1709, 0
        %v1791 = vsel %vm804, %v1712, 0
        %v1794 = vsel %vm804, %v1715, 0
        %v1797 = vsel %vm804, %v1718, 0
        %v1800 = vsel %vm804, %v1721, 0
        %1802 = vmatprep.subr.bf16.mxu0 0
        %1803 = vmatpush1.bf16.msra.mxu0 %v1238
        %1804 = vmatprep.subr.bf16.mxu0 0
        %1805 = vmatpush1.bf16.msra.mxu0 %v1239
        %1806 = vmatprep.subr.bf16.mxu0 0
        %1807 = vmatpush1.bf16.msra.mxu0 %v1240
        %1808 = vmatprep.subr.bf16.mxu0 0
        %1809 = vmatpush1.bf16.msra.mxu0 %v1241
        %1810 = vmatprep.subr.bf16.mxu0 0
        %1811 = vmatpush1.bf16.msra.mxu0 %v1242
        %1812 = vmatprep.subr.bf16.mxu0 0
        %1813 = vmatpush1.bf16.msra.mxu0 %v1243
        %1814 = vmatprep.subr.bf16.mxu0 0
        %1815 = vmatpush1.bf16.msra.mxu0 %v1244
        %1816 = vmatprep.subr.bf16.mxu0 0
        %1817 = vmatpush1.bf16.msra.mxu0 %v1245
        %1818 = vmatprep.subr.bf16.mxu0 0
        %1819 = vmatpush1.bf16.msra.mxu0 %v1246
        %1820 = vmatprep.subr.bf16.mxu0 0
        %1821 = vmatpush1.bf16.msra.mxu0 %v1247
        %1822 = vmatprep.subr.bf16.mxu0 0
        %1823 = vmatpush1.bf16.msra.mxu0 %v1248
        %1824 = vmatprep.subr.bf16.mxu0 0
        %1825 = vmatpush1.bf16.msra.mxu0 %v1249
        %1826 = vmatprep.subr.bf16.mxu0 0
        %1827 = vmatpush1.bf16.msra.mxu0 %v1250
        %1828 = vmatprep.subr.bf16.mxu0 0
        %1829 = vmatpush1.bf16.msra.mxu0 %v1251
        %1830 = vmatprep.subr.bf16.mxu0 0
        %1831 = vmatpush1.bf16.msra.mxu0 %v1252
        %1832 = vmatprep.subr.bf16.mxu0 0
        %1833 = vmatpush1.bf16.msra.mxu0 %v1253
        %1834 = vmatprep.mubr.bf16.mxu0 %v1675
        %1835 = vmatmul.mubr.bf16.gmra.mrb[0].mxu0 %v1674
        %v1836 = vpop.f32.mrb[0].mxu0
        %v1837 = vadd.f32 %v1357, %v1836
        %v1838 = vpop.f32.mrb[0].mxu0
        %v1839 = vpop.f32.mrb[0].mxu0
        %v1840 = vadd.f32 %v1362, %v1839
        %v1841 = vpop.f32.mrb[0].mxu0
        %1842 = vmatprep.mubr.bf16.mxu0 %v1678
        %1843 = vmatmul.mubr.bf16.gmra.mrb[0].mxu0 %v1677
        %v1844 = vpop.f32.mrb[0].mxu0
        %v1845 = vadd.f32 %v1367, %v1844
        %v1846 = vpop.f32.mrb[0].mxu0
        %v1847 = vpop.f32.mrb[0].mxu0
        %v1848 = vadd.f32 %v1372, %v1847
        %v1849 = vpop.f32.mrb[0].mxu0
        %1850 = vmatprep.mubr.bf16.mxu0 %v1681
        %1851 = vmatmul.mubr.bf16.gmra.mrb[0].mxu0 %v1680
        %v1852 = vpop.f32.mrb[0].mxu0
        %v1853 = vadd.f32 %v1377, %v1852
        %v1854 = vpop.f32.mrb[0].mxu0
        %v1855 = vpop.f32.mrb[0].mxu0
        %v1856 = vadd.f32 %v1382, %v1855
        %v1857 = vpop.f32.mrb[0].mxu0
        %1858 = vmatprep.mubr.bf16.mxu0 %v1684
        %1859 = vmatmul.mubr.bf16.gmra.mrb[0].mxu0 %v1683
        %v1860 = vpop.f32.mrb[0].mxu0
        %v1861 = vadd.f32 %v1387, %v1860
        %v1862 = vpop.f32.mrb[0].mxu0
        %v1863 = vpop.f32.mrb[0].mxu0
        %v1864 = vadd.f32 %v1392, %v1863
        %v1865 = vpop.f32.mrb[0].mxu0
        %1866 = vmatprep.mubr.bf16.mxu0 %v1687
        %1867 = vmatmul.mubr.bf16.gmra.mrb[0].mxu0 %v1686
        %v1868 = vpop.f32.mrb[0].mxu0
        %v1869 = vadd.f32 %v1397, %v1868
        %v1870 = vpop.f32.mrb[0].mxu0
        %v1871 = vpop.f32.mrb[0].mxu0
        %v1872 = vadd.f32 %v1402, %v1871
        %v1873 = vpop.f32.mrb[0].mxu0
        %1874 = vmatprep.mubr.bf16.mxu0 %v1690
        %1875 = vmatmul.mubr.bf16.gmra.mrb[0].mxu0 %v1689
        %v1876 = vpop.f32.mrb[0].mxu0
        %v1877 = vadd.f32 %v1407, %v1876
        %v1878 = vpop.f32.mrb[0].mxu0
        %v1879 = vpop.f32.mrb[0].mxu0
        %v1880 = vadd.f32 %v1412, %v1879
        %v1881 = vpop.f32.mrb[0].mxu0
        %1882 = vmatprep.mubr.bf16.mxu0 %v1693
        %1883 = vmatmul.mubr.bf16.gmra.mrb[0].mxu0 %v1692
        %v1884 = vpop.f32.mrb[0].mxu0
        %v1885 = vadd.f32 %v1417, %v1884
        %v1886 = vpop.f32.mrb[0].mxu0
        %v1887 = vpop.f32.mrb[0].mxu0
        %v1888 = vadd.f32 %v1422, %v1887
        %v1889 = vpop.f32.mrb[0].mxu0
        %1890 = vmatprep.mubr.bf16.mxu0 %v1696
        %1891 = vmatmul.mubr.bf16.gmra.mrb[0].mxu0 %v1695
        %v1892 = vpop.f32.mrb[0].mxu0
        %v1893 = vadd.f32 %v1427, %v1892
        %v1894 = vpop.f32.mrb[0].mxu0
        %v1895 = vpop.f32.mrb[0].mxu0
        %v1896 = vadd.f32 %v1432, %v1895
        %v1897 = vpop.f32.mrb[0].mxu0
        %1898 = vmatprep.mubr.bf16.mxu0 %v1699
        %1899 = vmatmul.mubr.bf16.gmra.mrb[0].mxu0 %v1698
        %v1900 = vpop.f32.mrb[0].mxu0
        %v1901 = vadd.f32 %v1437, %v1900
        %v1902 = vpop.f32.mrb[0].mxu0
        %v1903 = vpop.f32.mrb[0].mxu0
        %v1904 = vadd.f32 %v1442, %v1903
        %v1905 = vpop.f32.mrb[0].mxu0
        %1906 = vmatprep.mubr.bf16.mxu0 %v1702
        %1907 = vmatmul.mubr.bf16.gmra.mrb[0].mxu0 %v1701
        %v1908 = vpop.f32.mrb[0].mxu0
        %v1909 = vadd.f32 %v1447, %v1908
        %v1910 = vpop.f32.mrb[0].mxu0
        %v1911 = vpop.f32.mrb[0].mxu0
        %v1912 = vadd.f32 %v1452, %v1911
        %v1913 = vpop.f32.mrb[0].mxu0
        %1914 = vmatprep.mubr.bf16.mxu0 %v1705
        %1915 = vmatmul.mubr.bf16.gmra.mrb[0].mxu0 %v1704
        %v1916 = vpop.f32.mrb[0].mxu0
        %v1917 = vadd.f32 %v1457, %v1916
        %v1918 = vpop.f32.mrb[0].mxu0
        %v1919 = vpop.f32.mrb[0].mxu0
        %v1920 = vadd.f32 %v1462, %v1919
        %v1921 = vpop.f32.mrb[0].mxu0
        %1922 = vmatprep.mubr.bf16.mxu0 %v1708
        %1923 = vmatmul.mubr.bf16.gmra.mrb[0].mxu0 %v1707
        %v1924 = vpop.f32.mrb[0].mxu0
        %v1925 = vadd.f32 %v1467, %v1924
        %v1926 = vpop.f32.mrb[0].mxu0
        %v1927 = vpop.f32.mrb[0].mxu0
        %v1928 = vadd.f32 %v1472, %v1927
        %v1929 = vpop.f32.mrb[0].mxu0
        %1930 = vmatprep.mubr.bf16.mxu0 %v1711
        %1931 = vmatmul.mubr.bf16.gmra.mrb[0].mxu0 %v1710
        %v1932 = vpop.f32.mrb[0].mxu0
        %v1933 = vadd.f32 %v1477, %v1932
        %v1934 = vpop.f32.mrb[0].mxu0
        %v1935 = vpop.f32.mrb[0].mxu0
        %v1936 = vadd.f32 %v1482, %v1935
        %v1937 = vpop.f32.mrb[0].mxu0
        %1938 = vmatprep.mubr.bf16.mxu0 %v1714
        %1939 = vmatmul.mubr.bf16.gmra.mrb[0].mxu0 %v1713
        %v1940 = vpop.f32.mrb[0].mxu0
        %v1941 = vadd.f32 %v1487, %v1940
        %v1942 = vpop.f32.mrb[0].mxu0
        %v1943 = vpop.f32.mrb[0].mxu0
        %v1944 = vadd.f32 %v1492, %v1943
        %v1945 = vpop.f32.mrb[0].mxu0
        %1946 = vmatprep.mubr.bf16.mxu0 %v1717
        %1947 = vmatmul.mubr.bf16.gmra.mrb[0].mxu0 %v1716
        %v1948 = vpop.f32.mrb[0].mxu0
        %v1949 = vadd.f32 %v1497, %v1948
        %v1950 = vpop.f32.mrb[0].mxu0
        %v1951 = vpop.f32.mrb[0].mxu0
        %v1952 = vadd.f32 %v1502, %v1951
        %v1953 = vpop.f32.mrb[0].mxu0
        %1954 = vmatprep.mubr.bf16.mxu0 %v1720
        %1955 = vmatmul.mubr.bf16.gmra.mrb[0].mxu0 %v1719
        %v1956 = vpop.f32.mrb[0].mxu0
        %v1957 = vadd.f32 %v1507, %v1956
        %v1958 = vpop.f32.mrb[0].mxu0
        %v1959 = vpop.f32.mrb[0].mxu0
        %v1960 = vadd.f32 %v1512, %v1959
        %v1961 = vpop.f32.mrb[0].mxu0
        %1962 = vdwg.mxu0
        %1963 = vmatprep.subr.bf16.mxu0 0
        %1964 = vmatpush1.bf16.msra.mxu0 %v1254
        %1965 = vmatprep.subr.bf16.mxu0 0
        %1966 = vmatpush1.bf16.msra.mxu0 %v1255
        %1967 = vmatprep.subr.bf16.mxu0 0
        %1968 = vmatpush1.bf16.msra.mxu0 %v1256
        %1969 = vmatprep.subr.bf16.mxu0 0
        %1970 = vmatpush1.bf16.msra.mxu0 %v1257
        %1971 = vmatprep.subr.bf16.mxu0 0
        %1972 = vmatpush1.bf16.msra.mxu0 0
        %1973 = vmatprep.subr.bf16.mxu0 0
        %1974 = vmatpush1.bf16.msra.mxu0 0
        %1975 = vmatprep.subr.bf16.mxu0 0
        %1976 = vmatpush1.bf16.msra.mxu0 0
        %1977 = vmatprep.subr.bf16.mxu0 0
        %1978 = vmatpush1.bf16.msra.mxu0 0
        %1979 = vmatprep.subr.bf16.mxu0 0
        %1980 = vmatpush1.bf16.msra.mxu0 0
        %1981 = vmatprep.subr.bf16.mxu0 0
        %1982 = vmatpush1.bf16.msra.mxu0 0
        %1983 = vmatprep.subr.bf16.mxu0 0
        %1984 = vmatpush1.bf16.msra.mxu0 0
        %1985 = vmatprep.subr.bf16.mxu0 0
        %1986 = vmatpush1.bf16.msra.mxu0 0
        %1987 = vmatprep.subr.bf16.mxu0 0
        %1988 = vmatpush1.bf16.msra.mxu0 0
        %1989 = vmatprep.subr.bf16.mxu0 0
        %1990 = vmatpush1.bf16.msra.mxu0 0
        %1991 = vmatprep.subr.bf16.mxu0 0
        %1992 = vmatpush1.bf16.msra.mxu0 0
        %1993 = vmatprep.subr.bf16.mxu0 0
        %1994 = vmatpush1.bf16.msra.mxu0 0
        %1995 = vmatprep.mubr.bf16.mxu0 0
        %1996 = vmatmul.mubr.bf16.gmra.mrb[0].mxu0 %v1755
        %v1997 = vpop.f32.mrb[0].mxu0
        %v1998 = vadd.f32 %v1837, %v1997
        %v1999 = vpop.f32.mrb[0].mxu0
        %v2000 = vpop.f32.mrb[0].mxu0
        %v2001 = vadd.f32 %v1840, %v2000
        %v2002 = vpop.f32.mrb[0].mxu0
        %2003 = vmatprep.mubr.bf16.mxu0 0
        %2004 = vmatmul.mubr.bf16.gmra.mrb[0].mxu0 %v1758
        %v2005 = vpop.f32.mrb[0].mxu0
        %v2006 = vadd.f32 %v1845, %v2005
        %v2007 = vpop.f32.mrb[0].mxu0
        %v2008 = vpop.f32.mrb[0].mxu0
        %v2009 = vadd.f32 %v1848, %v2008
        %v2010 = vpop.f32.mrb[0].mxu0
        %2011 = vmatprep.mubr.bf16.mxu0 0
        %2012 = vmatmul.mubr.bf16.gmra.mrb[0].mxu0 %v1761
        %v2013 = vpop.f32.mrb[0].mxu0
        %v2014 = vadd.f32 %v1853, %v2013
        %v2015 = vpop.f32.mrb[0].mxu0
        %v2016 = vpop.f32.mrb[0].mxu0
        %v2017 = vadd.f32 %v1856, %v2016
        %v2018 = vpop.f32.mrb[0].mxu0
        %2019 = vmatprep.mubr.bf16.mxu0 0
        %2020 = vmatmul.mubr.bf16.gmra.mrb[0].mxu0 %v1764
        %v2021 = vpop.f32.mrb[0].mxu0
        %v2022 = vadd.f32 %v1861, %v2021
        %v2023 = vpop.f32.mrb[0].mxu0
        %v2024 = vpop.f32.mrb[0].mxu0
        %v2025 = vadd.f32 %v1864, %v2024
        %v2026 = vpop.f32.mrb[0].mxu0
        %2027 = vmatprep.mubr.bf16.mxu0 0
        %2028 = vmatmul.mubr.bf16.gmra.mrb[0].mxu0 %v1767
        %v2029 = vpop.f32.mrb[0].mxu0
        %v2030 = vadd.f32 %v1869, %v2029
        %v2031 = vpop.f32.mrb[0].mxu0
        %v2032 = vpop.f32.mrb[0].mxu0
        %v2033 = vadd.f32 %v1872, %v2032
        %v2034 = vpop.f32.mrb[0].mxu0
        %2035 = vmatprep.mubr.bf16.mxu0 0
        %2036 = vmatmul.mubr.bf16.gmra.mrb[0].mxu0 %v1770
        %v2037 = vpop.f32.mrb[0].mxu0
        %v2038 = vadd.f32 %v1877, %v2037
        %v2039 = vpop.f32.mrb[0].mxu0
        %v2040 = vpop.f32.mrb[0].mxu0
        %v2041 = vadd.f32 %v1880, %v2040
        %v2042 = vpop.f32.mrb[0].mxu0
        %2043 = vmatprep.mubr.bf16.mxu0 0
        %2044 = vmatmul.mubr.bf16.gmra.mrb[0].mxu0 %v1773
        %v2045 = vpop.f32.mrb[0].mxu0
        %v2046 = vadd.f32 %v1885, %v2045
        %v2047 = vpop.f32.mrb[0].mxu0
        %v2048 = vpop.f32.mrb[0].mxu0
        %v2049 = vadd.f32 %v1888, %v2048
        %v2050 = vpop.f32.mrb[0].mxu0
        %2051 = vmatprep.mubr.bf16.mxu0 0
        %2052 = vmatmul.mubr.bf16.gmra.mrb[0].mxu0 %v1776
        %v2053 = vpop.f32.mrb[0].mxu0
        %v2054 = vadd.f32 %v1893, %v2053
        %v2055 = vpop.f32.mrb[0].mxu0
        %v2056 = vpop.f32.mrb[0].mxu0
        %v2057 = vadd.f32 %v1896, %v2056
        %v2058 = vpop.f32.mrb[0].mxu0
        %2059 = vmatprep.mubr.bf16.mxu0 0
        %2060 = vmatmul.mubr.bf16.gmra.mrb[0].mxu0 %v1779
        %v2061 = vpop.f32.mrb[0].mxu0
        %v2062 = vadd.f32 %v1901, %v2061
        %v2063 = vpop.f32.mrb[0].mxu0
        %v2064 = vpop.f32.mrb[0].mxu0
        %v2065 = vadd.f32 %v1904, %v2064
        %v2066 = vpop.f32.mrb[0].mxu0
        %2067 = vmatprep.mubr.bf16.mxu0 0
        %2068 = vmatmul.mubr.bf16.gmra.mrb[0].mxu0 %v1782
        %v2069 = vpop.f32.mrb[0].mxu0
        %v2070 = vadd.f32 %v1909, %v2069
        %v2071 = vpop.f32.mrb[0].mxu0
        %v2072 = vpop.f32.mrb[0].mxu0
        %v2073 = vadd.f32 %v1912, %v2072
        %v2074 = vpop.f32.mrb[0].mxu0
        %2075 = vmatprep.mubr.bf16.mxu0 0
        %2076 = vmatmul.mubr.bf16.gmra.mrb[0].mxu0 %v1785
        %v2077 = vpop.f32.mrb[0].mxu0
        %v2078 = vadd.f32 %v1917, %v2077
        %v2079 = vpop.f32.mrb[0].mxu0
        %v2080 = vpop.f32.mrb[0].mxu0
        %v2081 = vadd.f32 %v1920, %v2080
        %v2082 = vpop.f32.mrb[0].mxu0
        %2083 = vmatprep.mubr.bf16.mxu0 0
        %2084 = vmatmul.mubr.bf16.gmra.mrb[0].mxu0 %v1788
        %v2085 = vpop.f32.mrb[0].mxu0
        %v2086 = vadd.f32 %v1925, %v2085
        %v2087 = vpop.f32.mrb[0].mxu0
        %v2088 = vpop.f32.mrb[0].mxu0
        %v2089 = vadd.f32 %v1928, %v2088
        %v2090 = vpop.f32.mrb[0].mxu0
        %2091 = vmatprep.mubr.bf16.mxu0 0
        %2092 = vmatmul.mubr.bf16.gmra.mrb[0].mxu0 %v1791
        %v2093 = vpop.f32.mrb[0].mxu0
        %v2094 = vadd.f32 %v1933, %v2093
        %v2095 = vpop.f32.mrb[0].mxu0
        %v2096 = vpop.f32.mrb[0].mxu0
        %v2097 = vadd.f32 %v1936, %v2096
        %v2098 = vpop.f32.mrb[0].mxu0
        %2099 = vmatprep.mubr.bf16.mxu0 0
        %2100 = vmatmul.mubr.bf16.gmra.mrb[0].mxu0 %v1794
        %v2101 = vpop.f32.mrb[0].mxu0
        %v2102 = vadd.f32 %v1941, %v2101
        %v2103 = vpop.f32.mrb[0].mxu0
        %v2104 = vpop.f32.mrb[0].mxu0
        %v2105 = vadd.f32 %v1944, %v2104
        %v2106 = vpop.f32.mrb[0].mxu0
        %2107 = vmatprep.mubr.bf16.mxu0 0
        %2108 = vmatmul.mubr.bf16.gmra.mrb[0].mxu0 %v1797
        %v2109 = vpop.f32.mrb[0].mxu0
        %v2110 = vadd.f32 %v1949, %v2109
        %v2111 = vpop.f32.mrb[0].mxu0
        %v2112 = vpop.f32.mrb[0].mxu0
        %v2113 = vadd.f32 %v1952, %v2112
        %v2114 = vpop.f32.mrb[0].mxu0
        %2115 = vmatprep.mubr.bf16.mxu0 0
        %2116 = vmatmul.mubr.bf16.gmra.mrb[0].mxu0 %v1800
        %v2117 = vpop.f32.mrb[0].mxu0
        %v2118 = vadd.f32 %v1957, %v2117
        %v2119 = vpop.f32.mrb[0].mxu0
        %v2120 = vpop.f32.mrb[0].mxu0
        %v2121 = vadd.f32 %v1960, %v2120
        %v2122 = vpop.f32.mrb[0].mxu0
        %2123 = vdwg.mxu0
        %v2124 = vpack.c.bf16 %v2001, %v1998
        %v2125 = vpack.c.bf16 %v2009, %v2006
        %v2126 = vpack.c.bf16 %v2017, %v2014
        %v2127 = vpack.c.bf16 %v2025, %v2022
        %v2128 = vpack.c.bf16 %v2033, %v2030
        %v2129 = vpack.c.bf16 %v2041, %v2038
        %v2130 = vpack.c.bf16 %v2049, %v2046
        %v2131 = vpack.c.bf16 %v2057, %v2054
        %v2132 = vpack.c.bf16 %v2065, %v2062
        %v2133 = vpack.c.bf16 %v2073, %v2070
        %v2134 = vpack.c.bf16 %v2081, %v2078
        %v2135 = vpack.c.bf16 %v2089, %v2086
        %v2136 = vpack.c.bf16 %v2097, %v2094
        %v2137 = vpack.c.bf16 %v2105, %v2102
        %v2138 = vpack.c.bf16 %v2113, %v2110
        %v2139 = vpack.c.bf16 %v2121, %v2118
        %v2140 = vmul.bf16 %v2124, %v2124
        %v2141 = vmul.bf16 %v2125, %v2125
        %v2142 = vmul.bf16 %v2126, %v2126
        %v2143 = vmul.bf16 %v2127, %v2127
        %v2144 = vmul.bf16 %v2128, %v2128
        %v2145 = vmul.bf16 %v2129, %v2129
        %v2146 = vmul.bf16 %v2130, %v2130
        %v2147 = vmul.bf16 %v2131, %v2131
        %v2148 = vmul.bf16 %v2132, %v2132
        %v2149 = vmul.bf16 %v2133, %v2133
        %v2150 = vmul.bf16 %v2134, %v2134
        %v2151 = vmul.bf16 %v2135, %v2135
        %v2152 = vmul.bf16 %v2136, %v2136
        %v2153 = vmul.bf16 %v2137, %v2137
        %v2154 = vmul.bf16 %v2138, %v2138
        %v2155 = vmul.bf16 %v2139, %v2139
        %v2156 = vmul.bf16 %v2124, %v2140
        %v2157 = vmul.bf16 %v2125, %v2141
        %v2158 = vmul.bf16 %v2126, %v2142
        %v2159 = vmul.bf16 %v2127, %v2143
        %v2160 = vmul.bf16 %v2128, %v2144
        %v2161 = vmul.bf16 %v2129, %v2145
        %v2162 = vmul.bf16 %v2130, %v2146
        %v2163 = vmul.bf16 %v2131, %v2147
        %v2164 = vmul.bf16 %v2132, %v2148
        %v2165 = vmul.bf16 %v2133, %v2149
        %v2166 = vmul.bf16 %v2134, %v2150
        %v2167 = vmul.bf16 %v2135, %v2151
        %v2168 = vmul.bf16 %v2136, %v2152
        %v2169 = vmul.bf16 %v2137, %v2153
        %v2170 = vmul.bf16 %v2138, %v2154
        %v2171 = vmul.bf16 %v2139, %v2155
        %v2172 = vmul.bf16 %v2156, 1027030327
        %v2173 = vmul.bf16 %v2157, 1027030327
        %v2174 = vmul.bf16 %v2158, 1027030327
        %v2175 = vmul.bf16 %v2159, 1027030327
        %v2176 = vmul.bf16 %v2160, 1027030327
        %v2177 = vmul.bf16 %v2161, 1027030327
        %v2178 = vmul.bf16 %v2162, 1027030327
        %v2179 = vmul.bf16 %v2163, 1027030327
        %v2180 = vmul.bf16 %v2164, 1027030327
        %v2181 = vmul.bf16 %v2165, 1027030327
        %v2182 = vmul.bf16 %v2166, 1027030327
        %v2183 = vmul.bf16 %v2167, 1027030327
        %v2184 = vmul.bf16 %v2168, 1027030327
        %v2185 = vmul.bf16 %v2169, 1027030327
        %v2186 = vmul.bf16 %v2170, 1027030327
        %v2187 = vmul.bf16 %v2171, 1027030327
        %v2188 = vadd.bf16 %v2124, %v2172
        %v2189 = vadd.bf16 %v2125, %v2173
        %v2190 = vadd.bf16 %v2126, %v2174
        %v2191 = vadd.bf16 %v2127, %v2175
        %v2192 = vadd.bf16 %v2128, %v2176
        %v2193 = vadd.bf16 %v2129, %v2177
        %v2194 = vadd.bf16 %v2130, %v2178
        %v2195 = vadd.bf16 %v2131, %v2179
        %v2196 = vadd.bf16 %v2132, %v2180
        %v2197 = vadd.bf16 %v2133, %v2181
        %v2198 = vadd.bf16 %v2134, %v2182
        %v2199 = vadd.bf16 %v2135, %v2183
        %v2200 = vadd.bf16 %v2136, %v2184
        %v2201 = vadd.bf16 %v2137, %v2185
        %v2202 = vadd.bf16 %v2138, %v2186
        %v2203 = vadd.bf16 %v2139, %v2187
        %v2204 = vmul.bf16 %v2188, 1061961548
        %v2205 = vmul.bf16 %v2189, 1061961548
        %v2206 = vmul.bf16 %v2190, 1061961548
        %v2207 = vmul.bf16 %v2191, 1061961548
        %v2208 = vmul.bf16 %v2192, 1061961548
        %v2209 = vmul.bf16 %v2193, 1061961548
        %v2210 = vmul.bf16 %v2194, 1061961548
        %v2211 = vmul.bf16 %v2195, 1061961548
        %v2212 = vmul.bf16 %v2196, 1061961548
        %v2213 = vmul.bf16 %v2197, 1061961548
        %v2214 = vmul.bf16 %v2198, 1061961548
        %v2215 = vmul.bf16 %v2199, 1061961548
        %v2216 = vmul.bf16 %v2200, 1061961548
        %v2217 = vmul.bf16 %v2201, 1061961548
        %v2218 = vmul.bf16 %v2202, 1061961548
        %v2219 = vmul.bf16 %v2203, 1061961548
        %v2220 = vtanh.bf16.pop %v2204
        %v2221 = vtanh.bf16.pop %v2205
        %v2222 = vtanh.bf16.pop %v2206
        %v2223 = vtanh.bf16.pop %v2207
        %v2224 = vtanh.bf16.pop %v2208
        %v2225 = vtanh.bf16.pop %v2209
        %v2226 = vtanh.bf16.pop %v2210
        %v2227 = vtanh.bf16.pop %v2211
        %v2228 = vtanh.bf16.pop %v2212
        %v2229 = vtanh.bf16.pop %v2213
        %v2230 = vtanh.bf16.pop %v2214
        %v2231 = vtanh.bf16.pop %v2215
        %v2232 = vtanh.bf16.pop %v2216
        %v2233 = vtanh.bf16.pop %v2217
        %v2234 = vtanh.bf16.pop %v2218
        %v2235 = vtanh.bf16.pop %v2219
        %v2236 = vadd.bf16 %v2220, 1065369472
        %v2237 = vadd.bf16 %v2221, 1065369472
        %v2238 = vadd.bf16 %v2222, 1065369472
        %v2239 = vadd.bf16 %v2223, 1065369472
        %v2240 = vadd.bf16 %v2224, 1065369472
        %v2241 = vadd.bf16 %v2225, 1065369472
        %v2242 = vadd.bf16 %v2226, 1065369472
        %v2243 = vadd.bf16 %v2227, 1065369472
        %v2244 = vadd.bf16 %v2228, 1065369472
        %v2245 = vadd.bf16 %v2229, 1065369472
        %v2246 = vadd.bf16 %v2230, 1065369472
        %v2247 = vadd.bf16 %v2231, 1065369472
        %v2248 = vadd.bf16 %v2232, 1065369472
        %v2249 = vadd.bf16 %v2233, 1065369472
        %v2250 = vadd.bf16 %v2234, 1065369472
        %v2251 = vadd.bf16 %v2235, 1065369472
        %v2252 = vmul.bf16 %v2236, 1056980736
        %v2253 = vmul.bf16 %v2237, 1056980736
        %v2254 = vmul.bf16 %v2238, 1056980736
        %v2255 = vmul.bf16 %v2239, 1056980736
        %v2256 = vmul.bf16 %v2240, 1056980736
        %v2257 = vmul.bf16 %v2241, 1056980736
        %v2258 = vmul.bf16 %v2242, 1056980736
        %v2259 = vmul.bf16 %v2243, 1056980736
        %v2260 = vmul.bf16 %v2244, 1056980736
        %v2261 = vmul.bf16 %v2245, 1056980736
        %v2262 = vmul.bf16 %v2246, 1056980736
        %v2263 = vmul.bf16 %v2247, 1056980736
        %v2264 = vmul.bf16 %v2248, 1056980736
        %v2265 = vmul.bf16 %v2249, 1056980736
        %v2266 = vmul.bf16 %v2250, 1056980736
        %v2267 = vmul.bf16 %v2251, 1056980736
        %v2268 = vmul.bf16 %v2124, %v2252
        %v2269 = vmul.bf16 %v2125, %v2253
        %v2270 = vmul.bf16 %v2126, %v2254
        %v2271 = vmul.bf16 %v2127, %v2255
        %v2272 = vmul.bf16 %v2128, %v2256
        %v2273 = vmul.bf16 %v2129, %v2257
        %v2274 = vmul.bf16 %v2130, %v2258
        %v2275 = vmul.bf16 %v2131, %v2259
        %v2276 = vmul.bf16 %v2132, %v2260
        %v2277 = vmul.bf16 %v2133, %v2261
        %v2278 = vmul.bf16 %v2134, %v2262
        %v2279 = vmul.bf16 %v2135, %v2263
        %v2280 = vmul.bf16 %v2136, %v2264
        %v2281 = vmul.bf16 %v2137, %v2265
        %v2282 = vmul.bf16 %v2138, %v2266
        %v2283 = vmul.bf16 %v2139, %v2267
        %v2284 = vld [vmem:[%s5] sm:$0xff]
        %v2285 = vld [vmem:[%s5 + $0x8] sm:$0xff]
        %v2286 = vld [vmem:[%s5 + $0x10] sm:$0xff]
        %v2287 = vld [vmem:[%s5 + $0x18] sm:$0xff]
        %v2288 = vld [vmem:[%s5 + $0x20] sm:$0xff]
        %v2289 = vld [vmem:[%s5 + $0x28] sm:$0xff]
        %v2290 = vld [vmem:[%s5 + $0x30] sm:$0xff]
        %v2291 = vld [vmem:[%s5 + $0x38] sm:$0xff]
        %v2292 = vld [vmem:[%s5 + $0x40] sm:$0xff]
        %v2293 = vld [vmem:[%s5 + $0x48] sm:$0xff]
        %v2294 = vld [vmem:[%s5 + $0x50] sm:$0xff]
        %v2295 = vld [vmem:[%s5 + $0x58] sm:$0xff]
        %v2296 = vld [vmem:[%s5 + $0x60] sm:$0xff]
        %v2297 = vld [vmem:[%s5 + $0x68] sm:$0xff]
        %v2298 = vld [vmem:[%s5 + $0x70] sm:$0xff]
        %v2299 = vld [vmem:[%s5 + $0x78] sm:$0xff]
        %v2300 = vld [vmem:[%s6] sm:$0xff]
        %v2301 = vld [vmem:[%s6 + $0x8] sm:$0xff]
        %v2302 = vld [vmem:[%s6 + $0x10] sm:$0xff]
        %v2303 = vld [vmem:[%s6 + $0x18] sm:$0xff]
        %v2304 = vld [vmem:[%s6 + $0x20] sm:$0xff]
        %v2305 = vld [vmem:[%s6 + $0x28] sm:$0xff]
        %v2306 = vld [vmem:[%s6 + $0x30] sm:$0xff]
        %v2307 = vld [vmem:[%s6 + $0x38] sm:$0xff]
        %v2308 = vld [vmem:[%s6 + $0x40] sm:$0xff]
        %v2309 = vld [vmem:[%s6 + $0x48] sm:$0xff]
        %v2310 = vld [vmem:[%s6 + $0x50] sm:$0xff]
        %v2311 = vld [vmem:[%s6 + $0x58] sm:$0xff]
        %v2312 = vld [vmem:[%s6 + $0x60] sm:$0xff]
        %v2313 = vld [vmem:[%s6 + $0x68] sm:$0xff]
        %v2314 = vld [vmem:[%s6 + $0x70] sm:$0xff]
        %v2315 = vld [vmem:[%s6 + $0x78] sm:$0xff]
        %2317 = vset.pattern.permute.xlu0 0
        %2318 = vperm.xlu0 %2317, %v2300
        %v2319 = vpop.permute.xlu0 %2318
        %2322 = vset.pattern.permute.xlu0 0
        %2323 = vperm.xlu0 %2322, %v2301
        %v2324 = vpop.permute.xlu0 %2323
        %2327 = vset.pattern.permute.xlu0 0
        %2328 = vperm.xlu0 %2327, %v2302
        %v2329 = vpop.permute.xlu0 %2328
        %2332 = vset.pattern.permute.xlu0 0
        %2333 = vperm.xlu0 %2332, %v2303
        %v2334 = vpop.permute.xlu0 %2333
        %2337 = vset.pattern.permute.xlu0 0
        %2338 = vperm.xlu0 %2337, %v2304
        %v2339 = vpop.permute.xlu0 %2338
        %2342 = vset.pattern.permute.xlu0 0
        %2343 = vperm.xlu0 %2342, %v2305
        %v2344 = vpop.permute.xlu0 %2343
        %2347 = vset.pattern.permute.xlu0 0
        %2348 = vperm.xlu0 %2347, %v2306
        %v2349 = vpop.permute.xlu0 %2348
        %2352 = vset.pattern.permute.xlu0 0
        %2353 = vperm.xlu0 %2352, %v2307
        %v2354 = vpop.permute.xlu0 %2353
        %2357 = vset.pattern.permute.xlu0 0
        %2358 = vperm.xlu0 %2357, %v2308
        %v2359 = vpop.permute.xlu0 %2358
        %2362 = vset.pattern.permute.xlu0 0
        %2363 = vperm.xlu0 %2362, %v2309
        %v2364 = vpop.permute.xlu0 %2363
        %2367 = vset.pattern.permute.xlu0 0
        %2368 = vperm.xlu0 %2367, %v2310
        %v2369 = vpop.permute.xlu0 %2368
        %2372 = vset.pattern.permute.xlu0 0
        %2373 = vperm.xlu0 %2372, %v2311
        %v2374 = vpop.permute.xlu0 %2373
        %2377 = vset.pattern.permute.xlu0 0
        %2378 = vperm.xlu0 %2377, %v2312
        %v2379 = vpop.permute.xlu0 %2378
        %2382 = vset.pattern.permute.xlu0 0
        %2383 = vperm.xlu0 %2382, %v2313
        %v2384 = vpop.permute.xlu0 %2383
        %2387 = vset.pattern.permute.xlu0 0
        %2388 = vperm.xlu0 %2387, %v2314
        %v2389 = vpop.permute.xlu0 %2388
        %2392 = vset.pattern.permute.xlu0 0
        %2393 = vperm.xlu0 %2392, %v2315
        %v2394 = vpop.permute.xlu0 %2393
        %v2412 = vunpack.c.l.b16 %v2284
        %v2413 = vunpack.c.h.b16 %v2284
        %v2414 = vunpack.c.l.b16 %v2285
        %v2415 = vunpack.c.h.b16 %v2285
        %v2416 = vunpack.c.l.b16 %v2286
        %v2417 = vunpack.c.h.b16 %v2286
        %v2418 = vunpack.c.l.b16 %v2287
        %v2419 = vunpack.c.h.b16 %v2287
        %v2420 = vunpack.c.l.b16 %v2288
        %v2421 = vunpack.c.h.b16 %v2288
        %v2422 = vunpack.c.l.b16 %v2289
        %v2423 = vunpack.c.h.b16 %v2289
        %v2424 = vunpack.c.l.b16 %v2290
        %v2425 = vunpack.c.h.b16 %v2290
        %v2426 = vunpack.c.l.b16 %v2291
        %v2427 = vunpack.c.h.b16 %v2291
        %v2428 = vunpack.c.l.b16 %v2292
        %v2429 = vunpack.c.h.b16 %v2292
        %v2430 = vunpack.c.l.b16 %v2293
        %v2431 = vunpack.c.h.b16 %v2293
        %v2432 = vunpack.c.l.b16 %v2294
        %v2433 = vunpack.c.h.b16 %v2294
        %v2434 = vunpack.c.l.b16 %v2295
        %v2435 = vunpack.c.h.b16 %v2295
        %v2436 = vunpack.c.l.b16 %v2296
        %v2437 = vunpack.c.h.b16 %v2296
        %v2438 = vunpack.c.l.b16 %v2297
        %v2439 = vunpack.c.h.b16 %v2297
        %v2440 = vunpack.c.l.b16 %v2298
        %v2441 = vunpack.c.h.b16 %v2298
        %v2442 = vunpack.c.l.b16 %v2299
        %v2443 = vunpack.c.h.b16 %v2299
        %v2444 = vpack.c.b16 %v2414, %v2412
        %v2445 = vpack.c.b16 %v2415, %v2413
        %v2446 = vpack.c.b16 %v2418, %v2416
        %v2447 = vpack.c.b16 %v2419, %v2417
        %v2448 = vpack.c.b16 %v2422, %v2420
        %v2449 = vpack.c.b16 %v2423, %v2421
        %v2450 = vpack.c.b16 %v2426, %v2424
        %v2451 = vpack.c.b16 %v2427, %v2425
        %v2452 = vpack.c.b16 %v2430, %v2428
        %v2453 = vpack.c.b16 %v2431, %v2429
        %v2454 = vpack.c.b16 %v2434, %v2432
        %v2455 = vpack.c.b16 %v2435, %v2433
        %v2456 = vpack.c.b16 %v2438, %v2436
        %v2457 = vpack.c.b16 %v2439, %v2437
        %v2458 = vpack.c.b16 %v2442, %v2440
        %v2459 = vpack.c.b16 %v2443, %v2441
        %2476 = vmatprep.subr.bf16.mxu0 0
        %2477 = vmatpush1.bf16.msra.mxu0 %v2268
        %2478 = vmatprep.subr.bf16.mxu0 0
        %2479 = vmatpush1.bf16.msra.mxu0 %v2269
        %2480 = vmatprep.subr.bf16.mxu0 0
        %2481 = vmatpush1.bf16.msra.mxu0 %v2270
        %2482 = vmatprep.subr.bf16.mxu0 0
        %2483 = vmatpush1.bf16.msra.mxu0 %v2271
        %2484 = vmatprep.subr.bf16.mxu0 0
        %2485 = vmatpush1.bf16.msra.mxu0 %v2272
        %2486 = vmatprep.subr.bf16.mxu0 0
        %2487 = vmatpush1.bf16.msra.mxu0 %v2273
        %2488 = vmatprep.subr.bf16.mxu0 0
        %2489 = vmatpush1.bf16.msra.mxu0 %v2274
        %2490 = vmatprep.subr.bf16.mxu0 0
        %2491 = vmatpush1.bf16.msra.mxu0 %v2275
        %2492 = vmatprep.subr.bf16.mxu0 0
        %2493 = vmatpush1.bf16.msra.mxu0 %v2276
        %2494 = vmatprep.subr.bf16.mxu0 0
        %2495 = vmatpush1.bf16.msra.mxu0 %v2277
        %2496 = vmatprep.subr.bf16.mxu0 0
        %2497 = vmatpush1.bf16.msra.mxu0 %v2278
        %2498 = vmatprep.subr.bf16.mxu0 0
        %2499 = vmatpush1.bf16.msra.mxu0 %v2279
        %2500 = vmatprep.subr.bf16.mxu0 0
        %2501 = vmatpush1.bf16.msra.mxu0 %v2280
        %2502 = vmatprep.subr.bf16.mxu0 0
        %2503 = vmatpush1.bf16.msra.mxu0 %v2281
        %2504 = vmatprep.subr.bf16.mxu0 0
        %2505 = vmatpush1.bf16.msra.mxu0 %v2282
        %2506 = vmatprep.subr.bf16.mxu0 0
        %2507 = vmatpush1.bf16.msra.mxu0 %v2283
        %2508 = vmatprep.mubr.bf16.mxu0 %v2445
        %2509 = vmatmul.mubr.bf16.gmra.mrb[0].mxu0 %v2444
        %v2510 = vpop.f32.mrb[0].mxu0
        %v2511 = vadd.f32 %v2319, %v2510
        %v2512 = vpop.f32.mrb[0].mxu0
        %v2513 = vpop.f32.mrb[0].mxu0
        %v2514 = vadd.f32 %v2324, %v2513
        %v2515 = vpop.f32.mrb[0].mxu0
        %2516 = vmatprep.mubr.bf16.mxu0 %v2447
        %2517 = vmatmul.mubr.bf16.gmra.mrb[0].mxu0 %v2446
        %v2518 = vpop.f32.mrb[0].mxu0
        %v2519 = vadd.f32 %v2329, %v2518
        %v2520 = vpop.f32.mrb[0].mxu0
        %v2521 = vpop.f32.mrb[0].mxu0
        %v2522 = vadd.f32 %v2334, %v2521
        %v2523 = vpop.f32.mrb[0].mxu0
        %2524 = vmatprep.mubr.bf16.mxu0 %v2449
        %2525 = vmatmul.mubr.bf16.gmra.mrb[0].mxu0 %v2448
        %v2526 = vpop.f32.mrb[0].mxu0
        %v2527 = vadd.f32 %v2339, %v2526
        %v2528 = vpop.f32.mrb[0].mxu0
        %v2529 = vpop.f32.mrb[0].mxu0
        %v2530 = vadd.f32 %v2344, %v2529
        %v2531 = vpop.f32.mrb[0].mxu0
        %2532 = vmatprep.mubr.bf16.mxu0 %v2451
        %2533 = vmatmul.mubr.bf16.gmra.mrb[0].mxu0 %v2450
        %v2534 = vpop.f32.mrb[0].mxu0
        %v2535 = vadd.f32 %v2349, %v2534
        %v2536 = vpop.f32.mrb[0].mxu0
        %v2537 = vpop.f32.mrb[0].mxu0
        %v2538 = vadd.f32 %v2354, %v2537
        %v2539 = vpop.f32.mrb[0].mxu0
        %2540 = vmatprep.mubr.bf16.mxu0 %v2453
        %2541 = vmatmul.mubr.bf16.gmra.mrb[0].mxu0 %v2452
        %v2542 = vpop.f32.mrb[0].mxu0
        %v2543 = vadd.f32 %v2359, %v2542
        %v2544 = vpop.f32.mrb[0].mxu0
        %v2545 = vpop.f32.mrb[0].mxu0
        %v2546 = vadd.f32 %v2364, %v2545
        %v2547 = vpop.f32.mrb[0].mxu0
        %2548 = vmatprep.mubr.bf16.mxu0 %v2455
        %2549 = vmatmul.mubr.bf16.gmra.mrb[0].mxu0 %v2454
        %v2550 = vpop.f32.mrb[0].mxu0
        %v2551 = vadd.f32 %v2369, %v2550
        %v2552 = vpop.f32.mrb[0].mxu0
        %v2553 = vpop.f32.mrb[0].mxu0
        %v2554 = vadd.f32 %v2374, %v2553
        %v2555 = vpop.f32.mrb[0].mxu0
        %2556 = vmatprep.mubr.bf16.mxu0 %v2457
        %2557 = vmatmul.mubr.bf16.gmra.mrb[0].mxu0 %v2456
        %v2558 = vpop.f32.mrb[0].mxu0
        %v2559 = vadd.f32 %v2379, %v2558
        %v2560 = vpop.f32.mrb[0].mxu0
        %v2561 = vpop.f32.mrb[0].mxu0
        %v2562 = vadd.f32 %v2384, %v2561
        %v2563 = vpop.f32.mrb[0].mxu0
        %2564 = vmatprep.mubr.bf16.mxu0 %v2459
        %2565 = vmatmul.mubr.bf16.gmra.mrb[0].mxu0 %v2458
        %v2566 = vpop.f32.mrb[0].mxu0
        %v2567 = vadd.f32 %v2389, %v2566
        %v2568 = vpop.f32.mrb[0].mxu0
        %v2569 = vpop.f32.mrb[0].mxu0
        %v2570 = vadd.f32 %v2394, %v2569
        %v2571 = vpop.f32.mrb[0].mxu0
        %2572 = vdwg.mxu0
        %v2573 = vpack.c.bf16 %v2514, %v2511
        %v2574 = vpack.c.bf16 %v2522, %v2519
        %v2575 = vpack.c.bf16 %v2530, %v2527
        %v2576 = vpack.c.bf16 %v2538, %v2535
        %v2577 = vpack.c.bf16 %v2546, %v2543
        %v2578 = vpack.c.bf16 %v2554, %v2551
        %v2579 = vpack.c.bf16 %v2562, %v2559
        %v2580 = vpack.c.bf16 %v2570, %v2567
        %v2581 = vmul.bf16 %v2573, %v2573
        %v2582 = vmul.bf16 %v2574, %v2574
        %v2583 = vmul.bf16 %v2575, %v2575
        %v2584 = vmul.bf16 %v2576, %v2576
        %v2585 = vmul.bf16 %v2577, %v2577
        %v2586 = vmul.bf16 %v2578, %v2578
        %v2587 = vmul.bf16 %v2579, %v2579
        %v2588 = vmul.bf16 %v2580, %v2580
        %v2589 = vmul.bf16 %v2573, %v2581
        %v2590 = vmul.bf16 %v2574, %v2582
        %v2591 = vmul.bf16 %v2575, %v2583
        %v2592 = vmul.bf16 %v2576, %v2584
        %v2593 = vmul.bf16 %v2577, %v2585
        %v2594 = vmul.bf16 %v2578, %v2586
        %v2595 = vmul.bf16 %v2579, %v2587
        %v2596 = vmul.bf16 %v2580, %v2588
        %v2597 = vmul.bf16 %v2589, 1027030327
        %v2598 = vmul.bf16 %v2590, 1027030327
        %v2599 = vmul.bf16 %v2591, 1027030327
        %v2600 = vmul.bf16 %v2592, 1027030327
        %v2601 = vmul.bf16 %v2593, 1027030327
        %v2602 = vmul.bf16 %v2594, 1027030327
        %v2603 = vmul.bf16 %v2595, 1027030327
        %v2604 = vmul.bf16 %v2596, 1027030327
        %v2605 = vadd.bf16 %v2573, %v2597
        %v2606 = vadd.bf16 %v2574, %v2598
        %v2607 = vadd.bf16 %v2575, %v2599
        %v2608 = vadd.bf16 %v2576, %v2600
        %v2609 = vadd.bf16 %v2577, %v2601
        %v2610 = vadd.bf16 %v2578, %v2602
        %v2611 = vadd.bf16 %v2579, %v2603
        %v2612 = vadd.bf16 %v2580, %v2604
        %v2613 = vmul.bf16 %v2605, 1061961548
        %v2614 = vmul.bf16 %v2606, 1061961548
        %v2615 = vmul.bf16 %v2607, 1061961548
        %v2616 = vmul.bf16 %v2608, 1061961548
        %v2617 = vmul.bf16 %v2609, 1061961548
        %v2618 = vmul.bf16 %v2610, 1061961548
        %v2619 = vmul.bf16 %v2611, 1061961548
        %v2620 = vmul.bf16 %v2612, 1061961548
        %v2621 = vtanh.bf16.pop %v2613
        %v2622 = vtanh.bf16.pop %v2614
        %v2623 = vtanh.bf16.pop %v2615
        %v2624 = vtanh.bf16.pop %v2616
        %v2625 = vtanh.bf16.pop %v2617
        %v2626 = vtanh.bf16.pop %v2618
        %v2627 = vtanh.bf16.pop %v2619
        %v2628 = vtanh.bf16.pop %v2620
        %v2629 = vadd.bf16 %v2621, 1065369472
        %v2630 = vadd.bf16 %v2622, 1065369472
        %v2631 = vadd.bf16 %v2623, 1065369472
        %v2632 = vadd.bf16 %v2624, 1065369472
        %v2633 = vadd.bf16 %v2625, 1065369472
        %v2634 = vadd.bf16 %v2626, 1065369472
        %v2635 = vadd.bf16 %v2627, 1065369472
        %v2636 = vadd.bf16 %v2628, 1065369472
        %v2637 = vmul.bf16 %v2629, 1056980736
        %v2638 = vmul.bf16 %v2630, 1056980736
        %v2639 = vmul.bf16 %v2631, 1056980736
        %v2640 = vmul.bf16 %v2632, 1056980736
        %v2641 = vmul.bf16 %v2633, 1056980736
        %v2642 = vmul.bf16 %v2634, 1056980736
        %v2643 = vmul.bf16 %v2635, 1056980736
        %v2644 = vmul.bf16 %v2636, 1056980736
        %v2645 = vmul.bf16 %v2573, %v2637
        %v2646 = vmul.bf16 %v2574, %v2638
        %v2647 = vmul.bf16 %v2575, %v2639
        %v2648 = vmul.bf16 %v2576, %v2640
        %v2649 = vmul.bf16 %v2577, %v2641
        %v2650 = vmul.bf16 %v2578, %v2642
        %v2651 = vmul.bf16 %v2579, %v2643
        %v2652 = vmul.bf16 %v2580, %v2644
        %v2653 = vld [vmem:[%s7] sm:$0xf]
        %v2654 = vld [vmem:[%s7 + $0x4] sm:$0xf]
        %v2655 = vld [vmem:[%s7 + $0x8] sm:$0xf]
        %v2656 = vld [vmem:[%s7 + $0xc] sm:$0xf]
        %v2657 = vld [vmem:[%s8] sm:$0xff]
        %v2658 = vld [vmem:[%s8 + $0x8] sm:$0xff]
        %v2659 = vld [vmem:[%s8 + $0x10] sm:$0xff]
        %v2660 = vld [vmem:[%s8 + $0x18] sm:$0xff]
        %2662 = vset.pattern.permute.xlu0 0
        %2663 = vperm.xlu0 %2662, %v2657
        %v2664 = vpop.permute.xlu0 %2663
        %2667 = vset.pattern.permute.xlu0 0
        %2668 = vperm.xlu0 %2667, %v2658
        %v2669 = vpop.permute.xlu0 %2668
        %2672 = vset.pattern.permute.xlu0 0
        %2673 = vperm.xlu0 %2672, %v2659
        %v2674 = vpop.permute.xlu0 %2673
        %2677 = vset.pattern.permute.xlu0 0
        %2678 = vperm.xlu0 %2677, %v2660
        %v2679 = vpop.permute.xlu0 %2678
        %v2685 = vunpack.c.l.b16 %v2653
        %v2686 = vunpack.c.l.b16 %v2654
        %v2687 = vunpack.c.l.b16 %v2655
        %v2688 = vunpack.c.l.b16 %v2656
        %v2689 = vpack.c.b16 %v2686, %v2685
        %v2690 = vpack.c.b16 %v2688, %v2687
        %2693 = vmatprep.subr.bf16.mxu0 0
        %2694 = vmatpush1.bf16.msra.mxu0 %v2645
        %2695 = vmatprep.subr.bf16.mxu0 0
        %2696 = vmatpush1.bf16.msra.mxu0 %v2646
        %2697 = vmatprep.subr.bf16.mxu0 0
        %2698 = vmatpush1.bf16.msra.mxu0 %v2647
        %2699 = vmatprep.subr.bf16.mxu0 0
        %2700 = vmatpush1.bf16.msra.mxu0 %v2648
        %2701 = vmatprep.subr.bf16.mxu0 0
        %2702 = vmatpush1.bf16.msra.mxu0 %v2649
        %2703 = vmatprep.subr.bf16.mxu0 0
        %2704 = vmatpush1.bf16.msra.mxu0 %v2650
        %2705 = vmatprep.subr.bf16.mxu0 0
        %2706 = vmatpush1.bf16.msra.mxu0 %v2651
        %2707 = vmatprep.subr.bf16.mxu0 0
        %2708 = vmatpush1.bf16.msra.mxu0 %v2652
        %2709 = vmatprep.subr.bf16.mxu0 0
        %2710 = vmatpush1.bf16.msra.mxu0 0
        %2711 = vmatprep.subr.bf16.mxu0 0
        %2712 = vmatpush1.bf16.msra.mxu0 0
        %2713 = vmatprep.subr.bf16.mxu0 0
        %2714 = vmatpush1.bf16.msra.mxu0 0
        %2715 = vmatprep.subr.bf16.mxu0 0
        %2716 = vmatpush1.bf16.msra.mxu0 0
        %2717 = vmatprep.subr.bf16.mxu0 0
        %2718 = vmatpush1.bf16.msra.mxu0 0
        %2719 = vmatprep.subr.bf16.mxu0 0
        %2720 = vmatpush1.bf16.msra.mxu0 0
        %2721 = vmatprep.subr.bf16.mxu0 0
        %2722 = vmatpush1.bf16.msra.mxu0 0
        %2723 = vmatprep.subr.bf16.mxu0 0
        %2724 = vmatpush1.bf16.msra.mxu0 0
        %2725 = vmatprep.mubr.bf16.mxu0 0
        %2726 = vmatmul.mubr.bf16.gmra.mrb[0].mxu0 %v2689
        %v2727 = vpop.f32.mrb[0].mxu0
        %v2728 = vadd.f32 %v2664, %v2727
        %v2729 = vpop.f32.mrb[0].mxu0
        %v2730 = vpop.f32.mrb[0].mxu0
        %v2731 = vadd.f32 %v2669, %v2730
        %v2732 = vpop.f32.mrb[0].mxu0
        %2733 = vmatprep.mubr.bf16.mxu0 0
        %2734 = vmatmul.mubr.bf16.gmra.mrb[0].mxu0 %v2690
        %v2735 = vpop.f32.mrb[0].mxu0
        %v2736 = vadd.f32 %v2674, %v2735
        %v2737 = vpop.f32.mrb[0].mxu0
        %v2738 = vpop.f32.mrb[0].mxu0
        %v2739 = vadd.f32 %v2679, %v2738
        %v2740 = vpop.f32.mrb[0].mxu0
        %2741 = vdwg.mxu0
        %2742 = vst [vmem:[%s406] sm:$0xff] %v2728
        %2743 = vst [vmem:[%s406 + $0x8] sm:$0xff] %v2731
        %2744 = vst [vmem:[%s406 + $0x10] sm:$0xff] %v2736
        %2745 = vst [vmem:[%s406 + $0x18] sm:$0xff] %v2739
        %s2746 = sand.u32 %s238, 1
        %s2747 = sand.u32 %s238, 1
        %s2748 = smul.addr %s2747, 32
        %s2749 = scalar_lea.vmem [#allocation3], %s2748
        // Predicated region
        $region95: #{entropy_parameters_pallas.1} parent=89 // pred_check
          %p2750 = pneg %p248
        $region96: #{entropy_parameters_pallas.1} parent=89 // pred_check_branch
          %2752 = sbr.rel (%p2750) target = $region98
        $region97: #{entropy_parameters_pallas.1} parent=89 // pred_region
          %s2753 = smul.addr %s24, 8
          %s2754 = sadd.s32 %s25, %s2753
          %s2755 = smul.addr %s2754, 8
          %s2756 = scalar_lea.vmem %s9, %s2755
          // Predicated region
          $region99: #{entropy_parameters_pallas.1} parent=97 // pred_check
            _
          $region100: #{entropy_parameters_pallas.1} parent=97 // pred_check_branch
            %2758 = sbr.rel (0) target = $region102
          $region101: #{entropy_parameters_pallas.1} parent=97 // pred_region
            // Predicated region
            $region103: #{entropy_parameters_pallas.1} parent=101 // pred_check
              _
            $region104: #{entropy_parameters_pallas.1} parent=101 // pred_check_branch
              %2760 = sbr.rel (0) target = $region106
            $region105: #{entropy_parameters_pallas.1} parent=101 // pred_region
              // Predicated region
              $region118: #{entropy_parameters_pallas.1} parent=105 // pred_check
                _
              $region119: #{entropy_parameters_pallas.1} parent=105 // pred_check_branch
                %2781 = sbr.rel (0) target = $region121
              $region120: #{entropy_parameters_pallas.1} parent=105 // pred_region
                loop: start=0, step=1, limit=1
                $region122: #{entropy_parameters_pallas.1} parent=120 // loop_pre_header
                  _
                $region123: #{entropy_parameters_pallas.1} parent=120 // loop_header
                  %s2783 = sphi 0, %s2787
                  %p2784 = scmp.ge.s32.totalorder %s2783, 1
                  %s2788 = sphi %s2749, %s2749
                  %s2789 = sphi %s2756, %s2756
                $region124: #{entropy_parameters_pallas.1} parent=120 // loop_header_branch
                  %2786 = sbr.rel (%p2784) target = $region128
                $region125: #{entropy_parameters_pallas.1} parent=120 // loop_body
                  %v2790 = vld [vmem:[%s2788] sm:$0xff]
                  %2791 = vst [vmem:[%s2789] sm:$0xff] %v2790
                  %v2792 = vld [vmem:[%s2788 + $0x8] sm:$0xff]
                  %2793 = vst [vmem:[%s2789 + $0x10] sm:$0xff] %v2792
                  %v2794 = vld [vmem:[%s2788 + $0x10] sm:$0xff]
                  %2795 = vst [vmem:[%s2789 + $0x20] sm:$0xff] %v2794
                  %v2796 = vld [vmem:[%s2788 + $0x18] sm:$0xff]
                  %2797 = vst [vmem:[%s2789 + $0x30] sm:$0xff] %v2796
                $region126: #{entropy_parameters_pallas.1} parent=120 // loop_footer
                  %s2787 = sadd.s32 1, %s2783
                $region127: #{entropy_parameters_pallas.1} parent=120 // loop_footer_branch
                  %2782 = sbr.rel target = $region123
                $region128: #{entropy_parameters_pallas.1} parent=120 // loop_exit
                  _
              $region121: #{entropy_parameters_pallas.1} parent=105 // pred_fallthru
                _
              // Predicated region
              $region129: #{entropy_parameters_pallas.1} parent=105 // pred_check
                _
              $region130: #{entropy_parameters_pallas.1} parent=105 // pred_check_branch
                %2799 = sbr.rel target = $region132
              $region131: #{entropy_parameters_pallas.1} parent=105 // pred_region
                _
              $region132: #{entropy_parameters_pallas.1} parent=105 // pred_fallthru
                _
            $region106: #{entropy_parameters_pallas.1} parent=101 // pred_fallthru
              _
            // Predicated region
            $region107: #{entropy_parameters_pallas.1} parent=101 // pred_check
              _
            $region108: #{entropy_parameters_pallas.1} parent=101 // pred_check_branch
              %2762 = sbr.rel target = $region110
            $region109: #{entropy_parameters_pallas.1} parent=101 // pred_region
              loop: start=0, step=1, limit=1
              $region111: #{entropy_parameters_pallas.1} parent=109 // loop_pre_header
                _
              $region112: #{entropy_parameters_pallas.1} parent=109 // loop_header
                %s2765 = sphi 0, %s2769
                %p2766 = scmp.ge.s32.totalorder %s2765, 1
                %s2770 = sphi %s2749, %s2749
                %s2771 = sphi %s2756, %s2756
              $region113: #{entropy_parameters_pallas.1} parent=109 // loop_header_branch
                %2768 = sbr.rel (%p2766) target = $region117
              $region114: #{entropy_parameters_pallas.1} parent=109 // loop_body
                %v2772 = vld [vmem:[%s2770] sm:$0xff]
                %2773 = vst [vmem:[%s2771] sm:$0xff] %v2772
                %v2774 = vld [vmem:[%s2770 + $0x8] sm:$0xff]
                %2775 = vst [vmem:[%s2771 + $0x10] sm:$0xff] %v2774
                %v2776 = vld [vmem:[%s2770 + $0x10] sm:$0xff]
                %2777 = vst [vmem:[%s2771 + $0x20] sm:$0xff] %v2776
                %v2778 = vld [vmem:[%s2770 + $0x18] sm:$0xff]
                %2779 = vst [vmem:[%s2771 + $0x30] sm:$0xff] %v2778
              $region115: #{entropy_parameters_pallas.1} parent=109 // loop_footer
                %s2769 = sadd.s32 1, %s2765
              $region116: #{entropy_parameters_pallas.1} parent=109 // loop_footer_branch
                %2764 = sbr.rel target = $region112
              $region117: #{entropy_parameters_pallas.1} parent=109 // loop_exit
                _
            $region110: #{entropy_parameters_pallas.1} parent=101 // pred_fallthru
              _
          $region102: #{entropy_parameters_pallas.1} parent=97 // pred_fallthru
            _
          %2800 = vnop
        $region98: #{entropy_parameters_pallas.1} parent=89 // pred_fallthru
          _
      $region90: #{entropy_parameters_pallas.1} parent=5 // pred_fallthru
        _
      %p2801 = scmp.le.s32.totalorder 2, %s15
      // Predicated region
      $region133: #{entropy_parameters_pallas.1} parent=5 // pred_check
        %p2802 = pneg %p2801
      $region134: #{entropy_parameters_pallas.1} parent=5 // pred_check_branch
        %2804 = sbr.rel (%p2802) target = $region136
      $region135: #{entropy_parameters_pallas.1} parent=5 // pred_region
        %s2805 = ssub.s32 %s15, 2
        // Predicated region
        $region137: #{entropy_parameters_pallas.1} parent=135 // pred_check
          %p2806 = pneg %p254
        $region138: #{entropy_parameters_pallas.1} parent=135 // pred_check_branch
          %2808 = sbr.rel (%p2806) target = $region140
        $region139: #{entropy_parameters_pallas.1} parent=135 // pred_region
          %s2809 = sand.u32 %s239, 1
          %s2810 = sand.u32 %s239, 1
          %s2811 = smul.addr %s2810, 32
          %s2812 = scalar_lea.vmem [#allocation3], %s2811
        $region140: #{entropy_parameters_pallas.1} parent=135 // pred_fallthru
          _
      $region136: #{entropy_parameters_pallas.1} parent=5 // pred_fallthru
        _
    $region6: #{entropy_parameters_pallas.1} parent=1 // loop_footer
      %s19 = sadd.s32 1, %s15
    $region7: #{entropy_parameters_pallas.1} parent=1 // loop_footer_branch
      %14 = sbr.rel target = $region3
    $region8: #{entropy_parameters_pallas.1} parent=1 // loop_exit
      _

</llo_original>
